<compile_context>
chip_gen: v7x
topology: tpu7x:2x2x1
jax: 0.10.0
libtpu: 0.0.40
codegen_flags: <defaults>
</compile_context>

<pallas_src>
import functools
import math

import jax
import jax.numpy as jnp
from jax.experimental import pallas as pl
from jax.experimental.pallas import tpu as pltpu

MiB = 1024 * 1024


# --------------------------------------------------------------------------
# Kernels
# --------------------------------------------------------------------------
def qkv_proj_kernel(q_ref, k_ref, v_ref,
                    wq_ref, bq_ref, wk_ref, bk_ref, wv_ref, bv_ref,
                    qh_ref, kh_ref, vh_ref, *, num_heads, inv_scale, compute_dtype):
    """One grid step = one (batch, seq-tile).

    q_ref/k_ref/v_ref: (1, TS, H) f32      w*_ref: (heads, H, Dh) cd
    b*_ref: (heads, 1, Dh) f32             *h_ref out: (1, heads, TS, Dh) cd
    The head regrouping is folded into the matmul (per-head split weights), so
    no in-kernel transpose is needed and the projection is done once per token.
    """
    cd = compute_dtype

    def project(x_ref, w_ref, b_ref, scale):
        x = x_ref[0].astype(cd)                                   # (L, H)
        xb = jnp.broadcast_to(x[None], (num_heads,) + x.shape)    # (heads, L, H)
        y = jax.lax.dot_general(xb, w_ref[...],
                                (((2,), (1,)), ((0,), (0,))),
                                preferred_element_type=jnp.float32)
        y = y + b_ref[...]                                        # (heads, L, Dh) f32
        if scale is not None:
            y = y * scale
        return y.astype(cd)

    qh_ref[0] = project(q_ref, wq_ref, bq_ref, inv_scale)         # pre-scaled once
    kh_ref[0] = project(k_ref, wk_ref, bk_ref, None)
    vh_ref[0] = project(v_ref, wv_ref, bv_ref, None)


def attn_kernel(qh_ref, kh_ref, vh_ref, mask_ref, *out_refs, compute_dtype):
    """One grid step = one (batch, query-tile) pair; all heads batched.

    qh_ref: (1, heads, TQ, Dh)   kh/vh_ref: (1, heads, S, Dh)
    mask_ref: (1, 1, TQ, S) int8 (nonzero == keep)
    out_refs = (ctx_ref, [attn_ref]); the attn store is skipped entirely when
    the caller did not request the probabilities.
    """
    cd = compute_dtype
    ctx_ref = out_refs[0]
    attn_ref = out_refs[1] if len(out_refs) > 1 else None

    q = qh_ref[0]                 # (heads, TQ, Dh) — already scaled by 1/sqrt(Dh)
    k = kh_ref[0]
    v = vh_ref[0]

    # Additive mask bias computed once per grid step from the int8 keep-mask.
    bias = jnp.where(mask_ref[0, 0] == 0, jnp.float32(-1e9), jnp.float32(0.0))

    # scores[h, q, k] = sum_d q[h, q, d] * k[h, k, d]
    scores = jax.lax.dot_general(q, k, (((2,), (2,)), ((0,), (0,))),
                                 preferred_element_type=jnp.float32)
    scores = scores + bias[None]

    # Numerically stable softmax over keys (f32); EUP reciprocal for the denom.
    m = jnp.max(scores, axis=-1, keepdims=True)
    p = jnp.exp(scores - m)
    attn = p * pl.reciprocal(jnp.sum(p, axis=-1, keepdims=True), approx=True)

    # TODO(synk): attention dropout (p=0.1) omitted — eval-mode identity.
    if attn_ref is not None:
        attn_ref[0] = attn.astype(attn_ref.dtype)

    # ctx[h, q, d] = sum_k attn[h, q, k] * v[h, k, d]
    ctx = jax.lax.dot_general(attn.astype(cd), v, (((2,), (1,)), ((0,), (0,))),
                              preferred_element_type=jnp.float32)
    ctx_ref[0] = ctx.astype(ctx_ref.dtype)


def out_proj_kernel(x_ref, w_ref, b_ref, o_ref):
    # Row-tiled output projection: (TILE_R, H) @ (H, H) + (1, H), lane-dense store.
    o_ref[...] = (jnp.dot(x_ref[...], w_ref[...],
                          preferred_element_type=jnp.float32)
                  + b_ref[...]).astype(o_ref.dtype)


# --------------------------------------------------------------------------
# Host-side tiling / VMEM-budget helpers
# --------------------------------------------------------------------------
def _round_down(x, m):
    return (x // m) * m


def _mosaic_params(dims, est_bytes):
    # Raise the scoped-VMEM limit (defaults: 16 MiB v5e / 32 MiB v6e) toward the
    # estimated working set, capped well under v7x's 64 MiB physical VMEM.
    limit = int(min(max(est_bytes * 3 // 2, 32 * MiB), 56 * MiB))
    return pltpu.CompilerParams(dimension_semantics=dims, vmem_limit_bytes=limit)


def _pick_q_tile(S, H, heads, cd_bytes, attn_bytes, budget_bytes):
    """Largest query tile whose per-step VMEM (double-buffered blocks plus the
    f32 score/probability intermediates) fits the budget.  Returns the full
    sequence when it fits, otherwise a multiple of 32 (safe for bf16/int8
    sublane packing) with a 128-row floor so the MXU stays fed."""
    fixed = 4 * S * H * cd_bytes                       # K, V blocks (2 buffers each)
    per_tq = (4 * H * cd_bytes                         # q in + ctx out (2 buffers each)
              + 2 * S                                  # int8 mask (2 buffers)
              + heads * S * (2 * attn_bytes + 8))      # attn out (2 bufs) + scores/p f32
    tq = max((budget_bytes - fixed) // per_tq, 0)
    tq = min(tq, 512, S)
    tq = max(tq, 128)                                  # documented floor (v5e guidance)
    if tq >= S:
        return S
    return max(32, _round_down(tq, 32))


def _attn_vmem_estimate(S, H, heads, tq, cd_bytes, attn_bytes):
    return (4 * S * H * cd_bytes
            + tq * (4 * H * cd_bytes + 2 * S + heads * S * (2 * attn_bytes + 8)))


# --------------------------------------------------------------------------
# Wrapper
# --------------------------------------------------------------------------
def multi_head_attention(q, k, v, mask, params, num_heads, *,
                         compute_dtype=jnp.bfloat16, attn_dtype=None,
                         return_attn=True, vmem_budget_bytes=32 * MiB,
                         seq_tile=512, row_tile=1024):
    B, S, H = q.shape
    assert H % num_heads == 0, "hidden_dim must be divisible by num_heads"
    Dh = H // num_heads
    cd = compute_dtype
    cd_bytes = jnp.dtype(cd).itemsize
    attn_dtype = cd if attn_dtype is None else attn_dtype
    attn_bytes = jnp.dtype(attn_dtype).itemsize if return_attn else 0
    inv_scale = 1.0 / math.sqrt(Dh)

    # Host-side layout plumbing: per-head weight split + compute-dtype cast.
    def split_w(w):   # (H_in, H_out) -> (heads, H_in, Dh)
        return w.reshape(H, num_heads, Dh).transpose(1, 0, 2).astype(cd)

    def split_b(b):   # (1, H) -> (heads, 1, Dh), kept f32 (added to f32 acc)
        return b.reshape(num_heads, 1, Dh).astype(jnp.float32)

    wq, wk, wv = split_w(params["wq"]), split_w(params["wk"]), split_w(params["wv"])
    bq, bk, bv = split_b(params["bq"]), split_b(params["bk"]), split_b(params["bv"])

    # int8 keep-mask: 4x less mask DMA / VMEM than the (B,1,S,S) f32 mask.
    if mask is None:
        mask_i8 = jnp.ones((B, 1, S, S), jnp.int8)
    else:
        mask_i8 = (jnp.broadcast_to(mask, (B, 1, S, S)) != 0).astype(jnp.int8)

    # ---- Kernel 1: Q/K/V projection (once per token, NOT once per q-tile) ----
    ts = S if S <= seq_tile else _round_down(seq_tile, 32)
    n_st = pl.cdiv(S, ts)
    proj_est = (6 * ts * H * 4 + 6 * ts * H * cd_bytes       # x blocks + head-major outs
                + 6 * H * H * cd_bytes                        # weights (2 bufs, pessimistic)
                + num_heads * ts * H * cd_bytes + ts * H * 4) # broadcast + f32 acc
    qh, kh, vh = pl.pallas_call(
        functools.partial(qkv_proj_kernel, num_heads=num_heads,
                          inv_scale=inv_scale, compute_dtype=cd),
        out_shape=tuple(jax.ShapeDtypeStruct((B, num_heads, S, Dh), cd)
                        for _ in range(3)),
        grid=(B, n_st),
        in_specs=[
            pl.BlockSpec((1, ts, H), lambda b, s: (b, s, 0)),            # q
            pl.BlockSpec((1, ts, H), lambda b, s: (b, s, 0)),            # k
            pl.BlockSpec((1, ts, H), lambda b, s: (b, s, 0)),            # v
            pl.BlockSpec((num_heads, H, Dh), lambda b, s: (0, 0, 0)),    # wq (resident)
            pl.BlockSpec((num_heads, 1, Dh), lambda b, s: (0, 0, 0)),    # bq
            pl.BlockSpec((num_heads, H, Dh), lambda b, s: (0, 0, 0)),    # wk
            pl.BlockSpec((num_heads, 1, Dh), lambda b, s: (0, 0, 0)),    # bk
            pl.BlockSpec((num_heads, H, Dh), lambda b, s: (0, 0, 0)),    # wv
            pl.BlockSpec((num_heads, 1, Dh), lambda b, s: (0, 0, 0)),    # bv
        ],
        out_specs=tuple(pl.BlockSpec((1, num_heads, ts, Dh),
                                     lambda b, s: (b, 0, s, 0)) for _ in range(3)),
        compiler_params=_mosaic_params(("parallel", "parallel"), proj_est),
    )(q, k, v, wq, bq, wk, bk, wv, bv)

    # ---- Kernel 2: attention (scores -> masked softmax -> context) ----------
    tq = _pick_q_tile(S, H, num_heads, cd_bytes, attn_bytes, vmem_budget_bytes)
    n_qt = pl.cdiv(S, tq)
    attn_est = _attn_vmem_estimate(S, H, num_heads, tq, cd_bytes, attn_bytes)

    out_shape = [jax.ShapeDtypeStruct((B, num_heads, S, Dh), cd)]
    out_specs = [pl.BlockSpec((1, num_heads, tq, Dh), lambda b, t: (b, 0, t, 0))]
    if return_attn:
        out_shape.append(jax.ShapeDtypeStruct((B, num_heads, S, S), attn_dtype))
        out_specs.append(pl.BlockSpec((1, num_heads, tq, S), lambda b, t: (b, 0, t, 0)))

    res = pl.pallas_call(
        functools.partial(attn_kernel, compute_dtype=cd),
        out_shape=tuple(out_shape),
        grid=(B, n_qt),
        in_specs=[
            pl.BlockSpec((1, num_heads, tq, Dh), lambda b, t: (b, 0, t, 0)),  # q tile
            pl.BlockSpec((1, num_heads, S, Dh), lambda b, t: (b, 0, 0, 0)),   # k (per batch)
            pl.BlockSpec((1, num_heads, S, Dh), lambda b, t: (b, 0, 0, 0)),   # v (per batch)
            pl.BlockSpec((1, 1, tq, S), lambda b, t: (b, 0, t, 0)),           # int8 mask
        ],
        out_specs=tuple(out_specs),
        compiler_params=_mosaic_params(("parallel", "parallel"), attn_est),
    )(qh, kh, vh, mask_i8)
    ctx = res[0]
    attn = res[1] if return_attn else None

    # BERT4rec quirk: .view(B, -1, hidden) without permuting heads back.
    # Minor dim changes Dh -> H, so this is a real XLA relayout copy (accepted
    # knowingly; O(B*S*H) in compute dtype, small next to the S^2 attn traffic).
    ctx2d = ctx.reshape(B * S, H)

    # ---- Kernel 3: output projection ----------------------------------------
    R = B * S
    tr = R if R <= row_tile else _round_down(row_tile, 32)
    oproj_est = 2 * tr * H * (cd_bytes + 4) + 2 * H * H * cd_bytes + tr * H * 4
    out = pl.pallas_call(
        out_proj_kernel,
        out_shape=jax.ShapeDtypeStruct((R, H), jnp.float32),
        grid=(pl.cdiv(R, tr),),
        in_specs=[
            pl.BlockSpec((tr, H), lambda i: (i, 0)),     # activations (row tiles)
            pl.BlockSpec((H, H), lambda i: (0, 0)),      # wo (resident)
            pl.BlockSpec((1, H), lambda i: (0, 0)),      # bo
        ],
        out_specs=pl.BlockSpec((tr, H), lambda i: (i, 0)),
        compiler_params=_mosaic_params(("parallel",), oproj_est),
    )(ctx2d, params["wo"].astype(cd), params["bo"].astype(jnp.float32))

    return out.reshape(B, S, H), attn


# --------------------------------------------------------------------------
# Pure-JAX reference + test harness
# --------------------------------------------------------------------------
def ref_mha(q, k, v, mask, params, num_heads):
    """Pure-JAX f32 reference matching the PyTorch forward exactly (eval mode)."""
    B, S, H = q.shape
    Dh = H // num_heads
    query = q @ params["wq"] + params["bq"]
    key = k @ params["wk"] + params["bk"]
    value = v @ params["wv"] + params["bv"]
    query = query.reshape(B, S, num_heads, Dh).transpose(0, 2, 1, 3)
    key = key.reshape(B, S, num_heads, Dh).transpose(0, 2, 1, 3)
    value = value.reshape(B, S, num_heads, Dh).transpose(0, 2, 1, 3)
    scores = jnp.einsum("bhqd,bhkd->bhqk", query, key) / math.sqrt(Dh)
    scores = jnp.where(mask == 0, -1e9, scores)
    attn = jax.nn.softmax(scores, axis=-1)
    ctx = jnp.einsum("bhqk,bhkd->bhqd", attn, value)
    ctx = ctx.reshape(B, -1, H)            # reproduces the .view() without permute
    out = ctx @ params["wo"] + params["bo"]
    return out, attn


def init_params(key, hidden):
    bound = 1.0 / math.sqrt(hidden)
    ks = jax.random.split(key, 8)
    u = lambda k, shape: jax.random.uniform(k, shape, jnp.float32, -bound, bound)
    return {
        "wq": u(ks[0], (hidden, hidden)), "bq": u(ks[1], (1, hidden)),
        "wk": u(ks[2], (hidden, hidden)), "bk": u(ks[3], (1, hidden)),
        "wv": u(ks[4], (hidden, hidden)), "bv": u(ks[5], (1, hidden)),
        "wo": u(ks[6], (hidden, hidden)), "bo": u(ks[7], (1, hidden)),
    }


if __name__ == "__main__":
    B, S, H, NUM_HEADS = 2, 8, 32, 4

    root = jax.random.PRNGKey(0)
    kq, kk, kv, kp = jax.random.split(root, 4)
    q = jax.random.normal(kq, (B, S, H), jnp.float32)
    k = jax.random.normal(kk, (B, S, H), jnp.float32)
    v = jax.random.normal(kv, (B, S, H), jnp.float32)
    params = init_params(kp, H)

    # Padding-style mask: batch 1 masks out the last two key positions.
    mask = jnp.ones((B, 1, S, S), jnp.float32).at[1, :, :, 6:].set(0.0)

    ref_out, ref_attn = ref_mha(q, k, v, mask, params, NUM_HEADS)

    # Default optimized path: bf16 MXU operands / bf16 attn output, f32 softmax.
    out, attn = multi_head_attention(q, k, v, mask, params, NUM_HEADS)
    jax.block_until_ready((out, attn))
    assert jnp.allclose(out, ref_out, atol=5e-2, rtol=5e-2), "bf16 output mismatch"
    assert jnp.allclose(attn.astype(jnp.float32), ref_attn,
                        atol=5e-2, rtol=5e-2), "bf16 attention mismatch"

    # Attention-probabilities output skipped entirely (no O(S^2) writeback).
    out_fast, attn_none = multi_head_attention(q, k, v, mask, params, NUM_HEADS,
                                               return_attn=False)
    jax.block_until_ready(out_fast)
    assert attn_none is None
    assert jnp.allclose(out_fast, ref_out, atol=5e-2, rtol=5e-2), "no-attn output mismatch"

    # f32 compute path: tighter structural check (only approx-reciprocal /
    # pre-scaling reordering differ from the reference).
    out32, attn32 = multi_head_attention(q, k, v, mask, params, NUM_HEADS,
                                         compute_dtype=jnp.float32)
    jax.block_until_ready((out32, attn32))
    assert jnp.allclose(out32, ref_out, atol=1e-2, rtol=1e-2), "f32 output mismatch"
    assert jnp.allclose(attn32, ref_attn, atol=1e-2, rtol=1e-2), "f32 attention mismatch"

    print("KERNEL_OK")
</pallas_src>

<mosaic_0001>
module attributes {stable_mosaic.version = 11 : i64} {
  func.func @qkv_proj_kernel(%arg0: i32, %arg1: i32, %arg2: memref<1x8x32xf32, #tpu.memory_space<vmem>>, %arg3: memref<1x8x32xf32, #tpu.memory_space<vmem>>, %arg4: memref<1x8x32xf32, #tpu.memory_space<vmem>>, %arg5: memref<4x32x8xbf16, #tpu.memory_space<vmem>>, %arg6: memref<4x1x8xf32, #tpu.memory_space<vmem>>, %arg7: memref<4x32x8xbf16, #tpu.memory_space<vmem>>, %arg8: memref<4x1x8xf32, #tpu.memory_space<vmem>>, %arg9: memref<4x32x8xbf16, #tpu.memory_space<vmem>>, %arg10: memref<4x1x8xf32, #tpu.memory_space<vmem>>, %arg11: memref<1x4x8x8xbf16, #tpu.memory_space<vmem>>, %arg12: memref<1x4x8x8xbf16, #tpu.memory_space<vmem>>, %arg13: memref<1x4x8x8xbf16, #tpu.memory_space<vmem>>) attributes {dimension_semantics = [#tpu.dimension_semantics<parallel>, #tpu.dimension_semantics<parallel>], iteration_bounds = array<i64: 2, 1>, scalar_prefetch = 0 : i64, scratch_operands = 0 : i64, tpu.core_type = #tpu.core_type<tc>, window_params = [{transform_indices = @transform_0, window_bounds = array<i64: 1, 8, 32>}, {transform_indices = @transform_1, window_bounds = array<i64: 1, 8, 32>}, {transform_indices = @transform_2, window_bounds = array<i64: 1, 8, 32>}, {pipeline_mode = #tpu.pipeline_mode<synchronous>, transform_indices = @transform_3, window_bounds = array<i64: 4, 32, 8>}, {pipeline_mode = #tpu.pipeline_mode<synchronous>, transform_indices = @transform_4, window_bounds = array<i64: 4, 1, 8>}, {pipeline_mode = #tpu.pipeline_mode<synchronous>, transform_indices = @transform_5, window_bounds = array<i64: 4, 32, 8>}, {pipeline_mode = #tpu.pipeline_mode<synchronous>, transform_indices = @transform_6, window_bounds = array<i64: 4, 1, 8>}, {pipeline_mode = #tpu.pipeline_mode<synchronous>, transform_indices = @transform_7, window_bounds = array<i64: 4, 32, 8>}, {pipeline_mode = #tpu.pipeline_mode<synchronous>, transform_indices = @transform_8, window_bounds = array<i64: 4, 1, 8>}, {transform_indices = @transform_9, window_bounds = array<i64: 1, 4, 8, 8>}, {transform_indices = @transform_10, window_bounds = array<i64: 1, 4, 8, 8>}, {transform_indices = @transform_11, window_bounds = array<i64: 1, 4, 8, 8>}]} {
    %c0 = arith.constant 0 : index
    %c0_0 = arith.constant 0 : index
    %c0_1 = arith.constant 0 : index
    %0 = vector.load %arg2[%c0, %c0_0, %c0_1] : memref<1x8x32xf32, #tpu.memory_space<vmem>>, vector<1x8x32xf32>
    %1 = vector.shape_cast %0 : vector<1x8x32xf32> to vector<8x32xf32>
    %2 = arith.truncf %1 : vector<8x32xf32> to vector<8x32xbf16>
    %3 = vector.shape_cast %2 : vector<8x32xbf16> to vector<1x8x32xbf16>
    %4 = vector.shape_cast %3 : vector<1x8x32xbf16> to vector<1x8x32xbf16>
    %5 = vector.broadcast %4 : vector<1x8x32xbf16> to vector<4x8x32xbf16>
    %c0_2 = arith.constant 0 : index
    %c0_3 = arith.constant 0 : index
    %c0_4 = arith.constant 0 : index
    %6 = vector.load %arg5[%c0_2, %c0_3, %c0_4] : memref<4x32x8xbf16, #tpu.memory_space<vmem>>, vector<4x32x8xbf16>
    %cst = arith.constant dense<0.000000e+00> : vector<4x8x8xf32>
    %7 = tpu.matmul %5, %6, %cst {dimension_numbers = #tpu.dot_dimension_numbers<[2], [1], [1], [2], [0, 0, 0, 1, 1, 2], [0], [0]>} : vector<4x8x32xbf16>, vector<4x32x8xbf16>, vector<4x8x8xf32> -> vector<4x8x8xf32>
    %c0_5 = arith.constant 0 : index
    %c0_6 = arith.constant 0 : index
    %c0_7 = arith.constant 0 : index
    %8 = vector.load %arg6[%c0_5, %c0_6, %c0_7] : memref<4x1x8xf32, #tpu.memory_space<vmem>>, vector<4x1x8xf32>
    %9 = vector.broadcast %8 : vector<4x1x8xf32> to vector<4x8x8xf32>
    %10 = arith.addf %7, %9 : vector<4x8x8xf32>
    %cst_8 = arith.constant 0.353553385 : f32
    %11 = vector.broadcast %cst_8 : f32 to vector<4x8x8xf32>
    %12 = arith.mulf %10, %11 : vector<4x8x8xf32>
    %13 = arith.truncf %12 : vector<4x8x8xf32> to vector<4x8x8xbf16>
    %c0_9 = arith.constant 0 : index
    %c0_10 = arith.constant 0 : index
    %c0_11 = arith.constant 0 : index
    %c0_12 = arith.constant 0 : index
    %14 = vector.load %arg11[%c0_9, %c0_10, %c0_11, %c0_12] : memref<1x4x8x8xbf16, #tpu.memory_space<vmem>>, vector<1x4x8x8xbf16>
    %15 = vector.shape_cast %14 : vector<1x4x8x8xbf16> to vector<4x8x8xbf16>
    %16 = vector.shape_cast %13 : vector<4x8x8xbf16> to vector<1x4x8x8xbf16>
    tpu.vector_store %arg11[%c0_9, %c0_10, %c0_11, %c0_12], %16 {strides = array<i32>} : memref<1x4x8x8xbf16, #tpu.memory_space<vmem>>, vector<1x4x8x8xbf16>,
    %c0_13 = arith.constant 0 : index
    %c0_14 = arith.constant 0 : index
    %c0_15 = arith.constant 0 : index
    %17 = vector.load %arg3[%c0_13, %c0_14, %c0_15] : memref<1x8x32xf32, #tpu.memory_space<vmem>>, vector<1x8x32xf32>
    %18 = vector.shape_cast %17 : vector<1x8x32xf32> to vector<8x32xf32>
    %19 = arith.truncf %18 : vector<8x32xf32> to vector<8x32xbf16>
    %20 = vector.shape_cast %19 : vector<8x32xbf16> to vector<1x8x32xbf16>
    %21 = vector.shape_cast %20 : vector<1x8x32xbf16> to vector<1x8x32xbf16>
    %22 = vector.broadcast %21 : vector<1x8x32xbf16> to vector<4x8x32xbf16>
    %c0_16 = arith.constant 0 : index
    %c0_17 = arith.constant 0 : index
    %c0_18 = arith.constant 0 : index
    %23 = vector.load %arg7[%c0_16, %c0_17, %c0_18] : memref<4x32x8xbf16, #tpu.memory_space<vmem>>, vector<4x32x8xbf16>
    %cst_19 = arith.constant dense<0.000000e+00> : vector<4x8x8xf32>
    %24 = tpu.matmul %22, %23, %cst_19 {dimension_numbers = #tpu.dot_dimension_numbers<[2], [1], [1], [2], [0, 0, 0, 1, 1, 2], [0], [0]>} : vector<4x8x32xbf16>, vector<4x32x8xbf16>, vector<4x8x8xf32> -> vector<4x8x8xf32>
    %c0_20 = arith.constant 0 : index
    %c0_21 = arith.constant 0 : index
    %c0_22 = arith.constant 0 : index
    %25 = vector.load %arg8[%c0_20, %c0_21, %c0_22] : memref<4x1x8xf32, #tpu.memory_space<vmem>>, vector<4x1x8xf32>
    %26 = vector.broadcast %25 : vector<4x1x8xf32> to vector<4x8x8xf32>
    %27 = arith.addf %24, %26 : vector<4x8x8xf32>
    %28 = arith.truncf %27 : vector<4x8x8xf32> to vector<4x8x8xbf16>
    %c0_23 = arith.constant 0 : index
    %c0_24 = arith.constant 0 : index
    %c0_25 = arith.constant 0 : index
    %c0_26 = arith.constant 0 : index
    %29 = vector.load %arg12[%c0_23, %c0_24, %c0_25, %c0_26] : memref<1x4x8x8xbf16, #tpu.memory_space<vmem>>, vector<1x4x8x8xbf16>
    %30 = vector.shape_cast %29 : vector<1x4x8x8xbf16> to vector<4x8x8xbf16>
    %31 = vector.shape_cast %28 : vector<4x8x8xbf16> to vector<1x4x8x8xbf16>
    tpu.vector_store %arg12[%c0_23, %c0_24, %c0_25, %c0_26], %31 {strides = array<i32>} : memref<1x4x8x8xbf16, #tpu.memory_space<vmem>>, vector<1x4x8x8xbf16>,
    %c0_27 = arith.constant 0 : index
    %c0_28 = arith.constant 0 : index
    %c0_29 = arith.constant 0 : index
    %32 = vector.load %arg4[%c0_27, %c0_28, %c0_29] : memref<1x8x32xf32, #tpu.memory_space<vmem>>, vector<1x8x32xf32>
    %33 = vector.shape_cast %32 : vector<1x8x32xf32> to vector<8x32xf32>
    %34 = arith.truncf %33 : vector<8x32xf32> to vector<8x32xbf16>
    %35 = vector.shape_cast %34 : vector<8x32xbf16> to vector<1x8x32xbf16>
    %36 = vector.shape_cast %35 : vector<1x8x32xbf16> to vector<1x8x32xbf16>
    %37 = vector.broadcast %36 : vector<1x8x32xbf16> to vector<4x8x32xbf16>
    %c0_30 = arith.constant 0 : index
    %c0_31 = arith.constant 0 : index
    %c0_32 = arith.constant 0 : index
    %38 = vector.load %arg9[%c0_30, %c0_31, %c0_32] : memref<4x32x8xbf16, #tpu.memory_space<vmem>>, vector<4x32x8xbf16>
    %cst_33 = arith.constant dense<0.000000e+00> : vector<4x8x8xf32>
    %39 = tpu.matmul %37, %38, %cst_33 {dimension_numbers = #tpu.dot_dimension_numbers<[2], [1], [1], [2], [0, 0, 0, 1, 1, 2], [0], [0]>} : vector<4x8x32xbf16>, vector<4x32x8xbf16>, vector<4x8x8xf32> -> vector<4x8x8xf32>
    %c0_34 = arith.constant 0 : index
    %c0_35 = arith.constant 0 : index
    %c0_36 = arith.constant 0 : index
    %40 = vector.load %arg10[%c0_34, %c0_35, %c0_36] : memref<4x1x8xf32, #tpu.memory_space<vmem>>, vector<4x1x8xf32>
    %41 = vector.broadcast %40 : vector<4x1x8xf32> to vector<4x8x8xf32>
    %42 = arith.addf %39, %41 : vector<4x8x8xf32>
    %43 = arith.truncf %42 : vector<4x8x8xf32> to vector<4x8x8xbf16>
    %c0_37 = arith.constant 0 : index
    %c0_38 = arith.constant 0 : index
    %c0_39 = arith.constant 0 : index
    %c0_40 = arith.constant 0 : index
    %44 = vector.load %arg13[%c0_37, %c0_38, %c0_39, %c0_40] : memref<1x4x8x8xbf16, #tpu.memory_space<vmem>>, vector<1x4x8x8xbf16>
    %45 = vector.shape_cast %44 : vector<1x4x8x8xbf16> to vector<4x8x8xbf16>
    %46 = vector.shape_cast %43 : vector<4x8x8xbf16> to vector<1x4x8x8xbf16>
    tpu.vector_store %arg13[%c0_37, %c0_38, %c0_39, %c0_40], %46 {strides = array<i32>} : memref<1x4x8x8xbf16, #tpu.memory_space<vmem>>, vector<1x4x8x8xbf16>,
    return
  }
  func.func @transform_0(%arg0: i32, %arg1: i32) -> (i32, i32, i32) {
    %c0_i32 = arith.constant 0 : i32
    %c0_i32_0 = arith.constant 0 : i32
    return %arg0, %arg1, %c0_i32 : i32, i32, i32
  }
  func.func @transform_1(%arg0: i32, %arg1: i32) -> (i32, i32, i32) {
    %c0_i32 = arith.constant 0 : i32
    %c0_i32_0 = arith.constant 0 : i32
    return %arg0, %arg1, %c0_i32 : i32, i32, i32
  }
  func.func @transform_2(%arg0: i32, %arg1: i32) -> (i32, i32, i32) {
    %c0_i32 = arith.constant 0 : i32
    %c0_i32_0 = arith.constant 0 : i32
    return %arg0, %arg1, %c0_i32 : i32, i32, i32
  }
  func.func @transform_3(%arg0: i32, %arg1: i32) -> (i32, i32, i32) {
    %c0_i32 = arith.constant 0 : i32
    %c0_i32_0 = arith.constant 0 : i32
    %c0_i32_1 = arith.constant 0 : i32
    %c0_i32_2 = arith.constant 0 : i32
    return %c0_i32, %c0_i32_0, %c0_i32_1 : i32, i32, i32
  }
  func.func @transform_4(%arg0: i32, %arg1: i32) -> (i32, i32, i32) {
    %c0_i32 = arith.constant 0 : i32
    %c0_i32_0 = arith.constant 0 : i32
    %c0_i32_1 = arith.constant 0 : i32
    %c0_i32_2 = arith.constant 0 : i32
    return %c0_i32, %c0_i32_0, %c0_i32_1 : i32, i32, i32
  }
  func.func @transform_5(%arg0: i32, %arg1: i32) -> (i32, i32, i32) {
    %c0_i32 = arith.constant 0 : i32
    %c0_i32_0 = arith.constant 0 : i32
    %c0_i32_1 = arith.constant 0 : i32
    %c0_i32_2 = arith.constant 0 : i32
    return %c0_i32, %c0_i32_0, %c0_i32_1 : i32, i32, i32
  }
  func.func @transform_6(%arg0: i32, %arg1: i32) -> (i32, i32, i32) {
    %c0_i32 = arith.constant 0 : i32
    %c0_i32_0 = arith.constant 0 : i32
    %c0_i32_1 = arith.constant 0 : i32
    %c0_i32_2 = arith.constant 0 : i32
    return %c0_i32, %c0_i32_0, %c0_i32_1 : i32, i32, i32
  }
  func.func @transform_7(%arg0: i32, %arg1: i32) -> (i32, i32, i32) {
    %c0_i32 = arith.constant 0 : i32
    %c0_i32_0 = arith.constant 0 : i32
    %c0_i32_1 = arith.constant 0 : i32
    %c0_i32_2 = arith.constant 0 : i32
    return %c0_i32, %c0_i32_0, %c0_i32_1 : i32, i32, i32
  }
  func.func @transform_8(%arg0: i32, %arg1: i32) -> (i32, i32, i32) {
    %c0_i32 = arith.constant 0 : i32
    %c0_i32_0 = arith.constant 0 : i32
    %c0_i32_1 = arith.constant 0 : i32
    %c0_i32_2 = arith.constant 0 : i32
    return %c0_i32, %c0_i32_0, %c0_i32_1 : i32, i32, i32
  }
  func.func @transform_9(%arg0: i32, %arg1: i32) -> (i32, i32, i32, i32) {
    %c0_i32 = arith.constant 0 : i32
    %c0_i32_0 = arith.constant 0 : i32
    %c0_i32_1 = arith.constant 0 : i32
    return %arg0, %c0_i32, %arg1, %c0_i32_0 : i32, i32, i32, i32
  }
  func.func @transform_10(%arg0: i32, %arg1: i32) -> (i32, i32, i32, i32) {
    %c0_i32 = arith.constant 0 : i32
    %c0_i32_0 = arith.constant 0 : i32
    %c0_i32_1 = arith.constant 0 : i32
    return %arg0, %c0_i32, %arg1, %c0_i32_0 : i32, i32, i32, i32
  }
  func.func @transform_11(%arg0: i32, %arg1: i32) -> (i32, i32, i32, i32) {
    %c0_i32 = arith.constant 0 : i32
    %c0_i32_0 = arith.constant 0 : i32
    %c0_i32_1 = arith.constant 0 : i32
    return %arg0, %c0_i32, %arg1, %c0_i32_0 : i32, i32, i32, i32
  }
}

</mosaic_0001>

<llo_original>
// kernel: tpu_custom_call.1
$region0: #{tpu_custom_call.1}
  #allocation0 [shape = 'u32[]', space=smem, size = 0x4, offset = 0x4, fixed_abs, tag = 'smem constant byte address 0x4 - core index']
  #allocation1 [shape = 'u32[144,128]{1,0:T(1,128)}', space=vmem, size = 0x12000, scoped, tag = 'internal scratch']
  %s0 = inlined_call_operand.vmem [shape: f32[2,8,32], index: 0, kind: input, shape index: {}]
  %s1 = inlined_call_operand.vmem [shape: f32[2,8,32], index: 1, kind: input, shape index: {}]
  %s2 = inlined_call_operand.vmem [shape: f32[2,8,32], index: 2, kind: input, shape index: {}]
  %s3 = inlined_call_operand.vmem [shape: bf16[4,32,8], index: 3, kind: input, shape index: {}]
  %s4 = inlined_call_operand.vmem [shape: f32[4,1,8], index: 4, kind: input, shape index: {}]
  %s5 = inlined_call_operand.vmem [shape: bf16[4,32,8], index: 5, kind: input, shape index: {}]
  %s6 = inlined_call_operand.vmem [shape: f32[4,1,8], index: 6, kind: input, shape index: {}]
  %s7 = inlined_call_operand.vmem [shape: bf16[4,32,8], index: 7, kind: input, shape index: {}]
  %s8 = inlined_call_operand.vmem [shape: f32[4,1,8], index: 8, kind: input, shape index: {}]
  %s9 = inlined_call_operand.hbm [shape: bf16[2,4,8,8], index: 9, kind: output, shape index: {0}]
  %s10 = inlined_call_operand.hbm [shape: bf16[2,4,8,8], index: 10, kind: output, shape index: {1}]
  %s11 = inlined_call_operand.hbm [shape: bf16[2,4,8,8], index: 11, kind: output, shape index: {2}]
  %12 = xla_tuple %s9, %s10, %s11
  %s13 = sld [smem:[#allocation0]]
  $region85: #{tpu_custom_call.1} parent=0
    _
  %s15 = ssub.s32 1, %s13
  %s16 = scalar_select 0, %s15, %s13
  $region1: #{tpu_custom_call.1} parent=0
    #allocation2 [shape = 'u8[16384]{0}', space=vmem, size = 0x4000, scoped, tag = 'output window, operand 0']
    #allocation3 [shape = 's32[2]{0}', space=sflag, size = 0x8, scoped, tag = 'scoped memory for tpu_custom_call.1']
    #allocation4 [shape = 'u8[16384]{0}', space=vmem, size = 0x4000, scoped, tag = 'output window, operand 1']
    #allocation5 [shape = 's32[2]{0}', space=sflag, size = 0x8, scoped, tag = 'scoped memory for tpu_custom_call.1']
    #allocation6 [shape = 'u8[16384]{0}', space=vmem, size = 0x4000, scoped, tag = 'output window, operand 2']
    %17 = vsyncpa [#allocation3], 0
    %s18 = scalar_lea.sflag [#allocation3], 1
    %19 = vsyncpa %s18, 0
    %20 = vsyncpa [#allocation5], 0
    %s21 = scalar_lea.sflag [#allocation5], 1
    %22 = vsyncpa %s21, 0
    loop: start=0, step=1, limit=4
    $region2: #{tpu_custom_call.1} parent=1 // loop_pre_header
      _
    $region3: #{tpu_custom_call.1} parent=1 // loop_header
      %s24 = sphi 0, %s28
      %p25 = scmp.ge.s32.totalorder %s24, 4
      %s31 = sphi 0, %s43
      %s32 = sphi 0, %s39
      %s33 = sphi 0, %s31
      %s34 = sphi 0, %s32
      %s35 = sphi 0, %s33
      %s36 = sphi 0, %s34
      %s48 = sphi 0, %s50
      %s51 = sphi 0, %s48
      %s52 = sphi 0, %s51
      %s68 = sphi 0, %s52
      %s76 = sphi 0, %s78
      %s79 = sphi 0, %s76
      %s80 = sphi 0, %s79
      %s96 = sphi 0, %s80
      %s104 = sphi 0, %s106
      %s107 = sphi 0, %s104
      %s108 = sphi 0, %s107
      %s124 = sphi 0, %s108
      %s128 = sphi 0, %s128
      %s130 = sphi 0, %s128
      %s131 = sphi 0, %s130
      %s145 = sphi 0, %s131
      %s149 = sphi 0, %s149
      %s151 = sphi 0, %s149
      %s152 = sphi 0, %s151
      %s166 = sphi 0, %s152
      %s170 = sphi 0, %s170
      %s172 = sphi 0, %s170
      %s173 = sphi 0, %s172
      %s187 = sphi 0, %s173
      %s191 = sphi 0, %s191
      %s193 = sphi 0, %s191
      %s194 = sphi 0, %s193
      %s208 = sphi 0, %s194
      %s212 = sphi 0, %s212
      %s214 = sphi 0, %s212
      %s215 = sphi 0, %s214
      %s229 = sphi 0, %s215
      %s233 = sphi 0, %s233
      %s235 = sphi 0, %s233
      %s236 = sphi 0, %s235
      %s250 = sphi 0, %s236
      %s258 = sphi 0, %s260
      %s261 = sphi 0, %s258
      %s262 = sphi 0, %s261
      %s278 = sphi 0, %s262
      %s286 = sphi 0, %s288
      %s289 = sphi 0, %s286
      %s290 = sphi 0, %s289
      %s306 = sphi 0, %s290
      %s314 = sphi 0, %s316
      %s317 = sphi 0, %s314
      %s318 = sphi 0, %s317
      %s334 = sphi 0, %s318
    $region4: #{tpu_custom_call.1} parent=1 // loop_header_branch
      %27 = sbr.rel (%p25) target = $region8
    $region5: #{tpu_custom_call.1} parent=1 // loop_body
      %s29 = ssub.s32 %s24, 1
      %s30 = ssub.s32 %s24, 2
      %s37 = sadd.s32 1, %s32
      %p38 = scmp.ge.s32.totalorder %s37, 1
      %s39 = scalar_select %p38, 0, %s37
      %s40 = sadd.s32 1, %s31
      %s41 = scalar_select %p38, %s40, %s31
      %p42 = scmp.ge.s32.totalorder %s41, 2
      %s43 = scalar_select %p42, 0, %s41
      %s44 = ssub.s32 %s31, %s43
      %s45 = ssub.s32 %s32, %s39
      %s46 = sor.u32 %s44, %s45
      %p47 = scmp.eq.s32.totalorder %s46, 0
      %s49 = sadd.s32 %s48, 1
      %s50 = scalar_select %p47, %s48, %s49
      %p53 = pneg %p47
      %p54 = scmp.eq.s32.totalorder %s24, 1
      %p55 = por %p53, %p54
      %p56 = scmp.ne.s32.totalorder %s48, %s51
      %p57 = scmp.eq.s32.totalorder %s24, 0
      %p58 = por %p56, %p57
      %p59 = scmp.ne.s32.totalorder %s48, %s51
      %p60 = scmp.eq.s32.totalorder %s29, 1
      %p61 = por %p59, %p60
      %p62 = scmp.ne.s32.totalorder %s51, %s52
      %p63 = scmp.eq.s32.totalorder %s29, 0
      %p64 = por %p62, %p63
      %p65 = scmp.ne.s32.totalorder %s51, %s52
      %p66 = scmp.eq.s32.totalorder %s30, 1
      %p67 = por %p65, %p66
      %p69 = scmp.ne.s32.totalorder %s52, %s68
      %p70 = scmp.eq.s32.totalorder %s30, 0
      %p71 = por %p69, %p70
      %s72 = ssub.s32 %s31, %s43
      %s73 = ssub.s32 %s32, %s39
      %s74 = sor.u32 %s72, %s73
      %p75 = scmp.eq.s32.totalorder %s74, 0
      %s77 = sadd.s32 %s76, 1
      %s78 = scalar_select %p75, %s76, %s77
      %p81 = pneg %p75
      %p82 = scmp.eq.s32.totalorder %s24, 1
      %p83 = por %p81, %p82
      %p84 = scmp.ne.s32.totalorder %s76, %s79
      %p85 = scmp.eq.s32.totalorder %s24, 0
      %p86 = por %p84, %p85
      %p87 = scmp.ne.s32.totalorder %s76, %s79
      %p88 = scmp.eq.s32.totalorder %s29, 1
      %p89 = por %p87, %p88
      %p90 = scmp.ne.s32.totalorder %s79, %s80
      %p91 = scmp.eq.s32.totalorder %s29, 0
      %p92 = por %p90, %p91
      %p93 = scmp.ne.s32.totalorder %s79, %s80
      %p94 = scmp.eq.s32.totalorder %s30, 1
      %p95 = por %p93, %p94
      %p97 = scmp.ne.s32.totalorder %s80, %s96
      %p98 = scmp.eq.s32.totalorder %s30, 0
      %p99 = por %p97, %p98
      %s100 = ssub.s32 %s31, %s43
      %s101 = ssub.s32 %s32, %s39
      %s102 = sor.u32 %s100, %s101
      %p103 = scmp.eq.s32.totalorder %s102, 0
      %s105 = sadd.s32 %s104, 1
      %s106 = scalar_select %p103, %s104, %s105
      %p109 = pneg %p103
      %p110 = scmp.eq.s32.totalorder %s24, 1
      %p111 = por %p109, %p110
      %p112 = scmp.ne.s32.totalorder %s104, %s107
      %p113 = scmp.eq.s32.totalorder %s24, 0
      %p114 = por %p112, %p113
      %p115 = scmp.ne.s32.totalorder %s104, %s107
      %p116 = scmp.eq.s32.totalorder %s29, 1
      %p117 = por %p115, %p116
      %p118 = scmp.ne.s32.totalorder %s107, %s108
      %p119 = scmp.eq.s32.totalorder %s29, 0
      %p120 = por %p118, %p119
      %p121 = scmp.ne.s32.totalorder %s107, %s108
      %p122 = scmp.eq.s32.totalorder %s30, 1
      %p123 = por %p121, %p122
      %p125 = scmp.ne.s32.totalorder %s108, %s124
      %p126 = scmp.eq.s32.totalorder %s30, 0
      %p127 = por %p125, %p126
      %s129 = sadd.s32 %s128, 1
      %p132 = scmp.eq.s32.totalorder %s24, 1
      %p133 = scmp.ne.s32.totalorder %s128, %s130
      %p134 = scmp.eq.s32.totalorder %s24, 0
      %p135 = por %p133, %p134
      %p136 = scmp.ne.s32.totalorder %s128, %s130
      %p137 = scmp.eq.s32.totalorder %s29, 1
      %p138 = por %p136, %p137
      %p139 = scmp.ne.s32.totalorder %s130, %s131
      %p140 = scmp.eq.s32.totalorder %s29, 0
      %p141 = por %p139, %p140
      %p142 = scmp.ne.s32.totalorder %s130, %s131
      %p143 = scmp.eq.s32.totalorder %s30, 1
      %p144 = por %p142, %p143
      %p146 = scmp.ne.s32.totalorder %s131, %s145
      %p147 = scmp.eq.s32.totalorder %s30, 0
      %p148 = por %p146, %p147
      %s150 = sadd.s32 %s149, 1
      %p153 = scmp.eq.s32.totalorder %s24, 1
      %p154 = scmp.ne.s32.totalorder %s149, %s151
      %p155 = scmp.eq.s32.totalorder %s24, 0
      %p156 = por %p154, %p155
      %p157 = scmp.ne.s32.totalorder %s149, %s151
      %p158 = scmp.eq.s32.totalorder %s29, 1
      %p159 = por %p157, %p158
      %p160 = scmp.ne.s32.totalorder %s151, %s152
      %p161 = scmp.eq.s32.totalorder %s29, 0
      %p162 = por %p160, %p161
      %p163 = scmp.ne.s32.totalorder %s151, %s152
      %p164 = scmp.eq.s32.totalorder %s30, 1
      %p165 = por %p163, %p164
      %p167 = scmp.ne.s32.totalorder %s152, %s166
      %p168 = scmp.eq.s32.totalorder %s30, 0
      %p169 = por %p167, %p168
      %s171 = sadd.s32 %s170, 1
      %p174 = scmp.eq.s32.totalorder %s24, 1
      %p175 = scmp.ne.s32.totalorder %s170, %s172
      %p176 = scmp.eq.s32.totalorder %s24, 0
      %p177 = por %p175, %p176
      %p178 = scmp.ne.s32.totalorder %s170, %s172
      %p179 = scmp.eq.s32.totalorder %s29, 1
      %p180 = por %p178, %p179
      %p181 = scmp.ne.s32.totalorder %s172, %s173
      %p182 = scmp.eq.s32.totalorder %s29, 0
      %p183 = por %p181, %p182
      %p184 = scmp.ne.s32.totalorder %s172, %s173
      %p185 = scmp.eq.s32.totalorder %s30, 1
      %p186 = por %p184, %p185
      %p188 = scmp.ne.s32.totalorder %s173, %s187
      %p189 = scmp.eq.s32.totalorder %s30, 0
      %p190 = por %p188, %p189
      %s192 = sadd.s32 %s191, 1
      %p195 = scmp.eq.s32.totalorder %s24, 1
      %p196 = scmp.ne.s32.totalorder %s191, %s193
      %p197 = scmp.eq.s32.totalorder %s24, 0
      %p198 = por %p196, %p197
      %p199 = scmp.ne.s32.totalorder %s191, %s193
      %p200 = scmp.eq.s32.totalorder %s29, 1
      %p201 = por %p199, %p200
      %p202 = scmp.ne.s32.totalorder %s193, %s194
      %p203 = scmp.eq.s32.totalorder %s29, 0
      %p204 = por %p202, %p203
      %p205 = scmp.ne.s32.totalorder %s193, %s194
      %p206 = scmp.eq.s32.totalorder %s30, 1
      %p207 = por %p205, %p206
      %p209 = scmp.ne.s32.totalorder %s194, %s208
      %p210 = scmp.eq.s32.totalorder %s30, 0
      %p211 = por %p209, %p210
      %s213 = sadd.s32 %s212, 1
      %p216 = scmp.eq.s32.totalorder %s24, 1
      %p217 = scmp.ne.s32.totalorder %s212, %s214
      %p218 = scmp.eq.s32.totalorder %s24, 0
      %p219 = por %p217, %p218
      %p220 = scmp.ne.s32.totalorder %s212, %s214
      %p221 = scmp.eq.s32.totalorder %s29, 1
      %p222 = por %p220, %p221
      %p223 = scmp.ne.s32.totalorder %s214, %s215
      %p224 = scmp.eq.s32.totalorder %s29, 0
      %p225 = por %p223, %p224
      %p226 = scmp.ne.s32.totalorder %s214, %s215
      %p227 = scmp.eq.s32.totalorder %s30, 1
      %p228 = por %p226, %p227
      %p230 = scmp.ne.s32.totalorder %s215, %s229
      %p231 = scmp.eq.s32.totalorder %s30, 0
      %p232 = por %p230, %p231
      %s234 = sadd.s32 %s233, 1
      %p237 = scmp.eq.s32.totalorder %s24, 1
      %p238 = scmp.ne.s32.totalorder %s233, %s235
      %p239 = scmp.eq.s32.totalorder %s24, 0
      %p240 = por %p238, %p239
      %p241 = scmp.ne.s32.totalorder %s233, %s235
      %p242 = scmp.eq.s32.totalorder %s29, 1
      %p243 = por %p241, %p242
      %p244 = scmp.ne.s32.totalorder %s235, %s236
      %p245 = scmp.eq.s32.totalorder %s29, 0
      %p246 = por %p244, %p245
      %p247 = scmp.ne.s32.totalorder %s235, %s236
      %p248 = scmp.eq.s32.totalorder %s30, 1
      %p249 = por %p247, %p248
      %p251 = scmp.ne.s32.totalorder %s236, %s250
      %p252 = scmp.eq.s32.totalorder %s30, 0
      %p253 = por %p251, %p252
      %s254 = ssub.s32 %s31, %s43
      %s255 = ssub.s32 %s32, %s39
      %s256 = sor.u32 %s254, %s255
      %p257 = scmp.eq.s32.totalorder %s256, 0
      %s259 = sadd.s32 %s258, 1
      %s260 = scalar_select %p257, %s258, %s259
      %p263 = pneg %p257
      %p264 = scmp.eq.s32.totalorder %s24, 1
      %p265 = por %p263, %p264
      %p266 = scmp.ne.s32.totalorder %s258, %s261
      %p267 = scmp.eq.s32.totalorder %s24, 0
      %p268 = por %p266, %p267
      %p269 = scmp.ne.s32.totalorder %s258, %s261
      %p270 = scmp.eq.s32.totalorder %s29, 1
      %p271 = por %p269, %p270
      %p272 = scmp.ne.s32.totalorder %s261, %s262
      %p273 = scmp.eq.s32.totalorder %s29, 0
      %p274 = por %p272, %p273
      %p275 = scmp.ne.s32.totalorder %s261, %s262
      %p276 = scmp.eq.s32.totalorder %s30, 1
      %p277 = por %p275, %p276
      %p279 = scmp.ne.s32.totalorder %s262, %s278
      %p280 = scmp.eq.s32.totalorder %s30, 0
      %p281 = por %p279, %p280
      %s282 = ssub.s32 %s31, %s43
      %s283 = ssub.s32 %s32, %s39
      %s284 = sor.u32 %s282, %s283
      %p285 = scmp.eq.s32.totalorder %s284, 0
      %s287 = sadd.s32 %s286, 1
      %s288 = scalar_select %p285, %s286, %s287
      %p291 = pneg %p285
      %p292 = scmp.eq.s32.totalorder %s24, 1
      %p293 = por %p291, %p292
      %p294 = scmp.ne.s32.totalorder %s286, %s289
      %p295 = scmp.eq.s32.totalorder %s24, 0
      %p296 = por %p294, %p295
      %p297 = scmp.ne.s32.totalorder %s286, %s289
      %p298 = scmp.eq.s32.totalorder %s29, 1
      %p299 = por %p297, %p298
      %p300 = scmp.ne.s32.totalorder %s289, %s290
      %p301 = scmp.eq.s32.totalorder %s29, 0
      %p302 = por %p300, %p301
      %p303 = scmp.ne.s32.totalorder %s289, %s290
      %p304 = scmp.eq.s32.totalorder %s30, 1
      %p305 = por %p303, %p304
      %p307 = scmp.ne.s32.totalorder %s290, %s306
      %p308 = scmp.eq.s32.totalorder %s30, 0
      %p309 = por %p307, %p308
      %s310 = ssub.s32 %s31, %s43
      %s311 = ssub.s32 %s32, %s39
      %s312 = sor.u32 %s310, %s311
      %p313 = scmp.eq.s32.totalorder %s312, 0
      %s315 = sadd.s32 %s314, 1
      %s316 = scalar_select %p313, %s314, %s315
      %p319 = pneg %p313
      %p320 = scmp.eq.s32.totalorder %s24, 1
      %p321 = por %p319, %p320
      %p322 = scmp.ne.s32.totalorder %s314, %s317
      %p323 = scmp.eq.s32.totalorder %s24, 0
      %p324 = por %p322, %p323
      %p325 = scmp.ne.s32.totalorder %s314, %s317
      %p326 = scmp.eq.s32.totalorder %s29, 1
      %p327 = por %p325, %p326
      %p328 = scmp.ne.s32.totalorder %s317, %s318
      %p329 = scmp.eq.s32.totalorder %s29, 0
      %p330 = por %p328, %p329
      %p331 = scmp.ne.s32.totalorder %s317, %s318
      %p332 = scmp.eq.s32.totalorder %s30, 1
      %p333 = por %p331, %p332
      %p335 = scmp.ne.s32.totalorder %s318, %s334
      %p336 = scmp.eq.s32.totalorder %s30, 0
      %p337 = por %p335, %p336
      %p338 = scmp.le.s32.totalorder 1, %s24
      %p339 = scmp.lt.s32.totalorder %s24, 3
      %p340 = pnand %p338, %p339
      %p341 = pneg %p340
      // Predicated region
      $region9: #{tpu_custom_call.1} parent=5 // pred_check
        _
      $region10: #{tpu_custom_call.1} parent=5 // pred_check_branch
        %343 = sbr.rel (%p340) target = $region12
      $region11: #{tpu_custom_call.1} parent=5 // pred_region
        %s344 = ssub.s32 %s24, 1
        // Predicated region
        $region13: #{tpu_custom_call.1} parent=11 // pred_check
          %p345 = pneg %p141
        $region14: #{tpu_custom_call.1} parent=11 // pred_check_branch
          %347 = sbr.rel (%p345) target = $region16
        $region15: #{tpu_custom_call.1} parent=11 // pred_region
          _
        $region16: #{tpu_custom_call.1} parent=11 // pred_fallthru
          _
        // Predicated region
        $region17: #{tpu_custom_call.1} parent=11 // pred_check
          %p348 = pneg %p162
        $region18: #{tpu_custom_call.1} parent=11 // pred_check_branch
          %350 = sbr.rel (%p348) target = $region20
        $region19: #{tpu_custom_call.1} parent=11 // pred_region
          _
        $region20: #{tpu_custom_call.1} parent=11 // pred_fallthru
          _
        // Predicated region
        $region21: #{tpu_custom_call.1} parent=11 // pred_check
          %p351 = pneg %p183
        $region22: #{tpu_custom_call.1} parent=11 // pred_check_branch
          %353 = sbr.rel (%p351) target = $region24
        $region23: #{tpu_custom_call.1} parent=11 // pred_region
          _
        $region24: #{tpu_custom_call.1} parent=11 // pred_fallthru
          _
        // Predicated region
        $region25: #{tpu_custom_call.1} parent=11 // pred_check
          %p354 = pneg %p204
        $region26: #{tpu_custom_call.1} parent=11 // pred_check_branch
          %356 = sbr.rel (%p354) target = $region28
        $region27: #{tpu_custom_call.1} parent=11 // pred_region
          _
        $region28: #{tpu_custom_call.1} parent=11 // pred_fallthru
          _
        // Predicated region
        $region29: #{tpu_custom_call.1} parent=11 // pred_check
          %p357 = pneg %p225
        $region30: #{tpu_custom_call.1} parent=11 // pred_check_branch
          %359 = sbr.rel (%p357) target = $region32
        $region31: #{tpu_custom_call.1} parent=11 // pred_region
          _
        $region32: #{tpu_custom_call.1} parent=11 // pred_fallthru
          _
        // Predicated region
        $region33: #{tpu_custom_call.1} parent=11 // pred_check
          %p360 = pneg %p246
        $region34: #{tpu_custom_call.1} parent=11 // pred_check_branch
          %362 = sbr.rel (%p360) target = $region36
        $region35: #{tpu_custom_call.1} parent=11 // pred_region
          _
        $region36: #{tpu_custom_call.1} parent=11 // pred_fallthru
          _
      $region12: #{tpu_custom_call.1} parent=5 // pred_fallthru
        _
      %p363 = scmp.lt.s32.totalorder %s24, 2
      // Predicated region
      $region37: #{tpu_custom_call.1} parent=5 // pred_check
        %p364 = pneg %p363
      $region38: #{tpu_custom_call.1} parent=5 // pred_check_branch
        %366 = sbr.rel (%p364) target = $region40
      $region39: #{tpu_custom_call.1} parent=5 // pred_region
        // Predicated region
        $region41: #{tpu_custom_call.1} parent=39 // pred_check
          %p367 = pneg %p58
        $region42: #{tpu_custom_call.1} parent=39 // pred_check_branch
          %369 = sbr.rel (%p367) target = $region44
        $region43: #{tpu_custom_call.1} parent=39 // pred_region
          %p370 = scmp.lt.s32.totalorder %s31, 1
          %s371 = scalar_select %p370, %s31, 1
          %p372 = scmp.lt.s32.totalorder %s32, 0
          %s373 = scalar_select %p372, %s32, 0
          %s374 = sadd.s32 %s373, %s371
          %s375 = smul.addr %s374, 8
          %s376 = scalar_lea.vmem %s0, %s375
        $region44: #{tpu_custom_call.1} parent=39 // pred_fallthru
          _
        // Predicated region
        $region45: #{tpu_custom_call.1} parent=39 // pred_check
          %p377 = pneg %p86
        $region46: #{tpu_custom_call.1} parent=39 // pred_check_branch
          %379 = sbr.rel (%p377) target = $region48
        $region47: #{tpu_custom_call.1} parent=39 // pred_region
          %p380 = scmp.lt.s32.totalorder %s31, 1
          %s381 = scalar_select %p380, %s31, 1
          %p382 = scmp.lt.s32.totalorder %s32, 0
          %s383 = scalar_select %p382, %s32, 0
          %s384 = sadd.s32 %s383, %s381
          %s385 = smul.addr %s384, 8
          %s386 = scalar_lea.vmem %s1, %s385
        $region48: #{tpu_custom_call.1} parent=39 // pred_fallthru
          _
        // Predicated region
        $region49: #{tpu_custom_call.1} parent=39 // pred_check
          %p387 = pneg %p114
        $region50: #{tpu_custom_call.1} parent=39 // pred_check_branch
          %389 = sbr.rel (%p387) target = $region52
        $region51: #{tpu_custom_call.1} parent=39 // pred_region
          %p390 = scmp.lt.s32.totalorder %s31, 1
          %s391 = scalar_select %p390, %s31, 1
          %p392 = scmp.lt.s32.totalorder %s32, 0
          %s393 = scalar_select %p392, %s32, 0
          %s394 = sadd.s32 %s393, %s391
          %s395 = smul.addr %s394, 8
          %s396 = scalar_lea.vmem %s2, %s395
        $region52: #{tpu_custom_call.1} parent=39 // pred_fallthru
          _
      $region40: #{tpu_custom_call.1} parent=5 // pred_fallthru
        _
      %p397 = scmp.le.s32.totalorder 1, %s24
      %p398 = scmp.lt.s32.totalorder %s24, 3
      %p399 = pnand %p397, %p398
      %p400 = pneg %p399
      // Predicated region
      $region53: #{tpu_custom_call.1} parent=5 // pred_check
        _
      $region54: #{tpu_custom_call.1} parent=5 // pred_check_branch
        %402 = sbr.rel (%p399) target = $region56
      $region55: #{tpu_custom_call.1} parent=5 // pred_region
        %s403 = ssub.s32 %s24, 1
        %p404 = scmp.lt.s32.totalorder %s33, 1
        %s405 = scalar_select %p404, %s33, 1
        %p406 = scmp.lt.s32.totalorder %s34, 0
        %s407 = scalar_select %p406, %s34, 0
        %s408 = sadd.s32 %s407, %s405
        %s409 = smul.addr %s408, 8
        %s410 = scalar_lea.vmem %s0, %s409
        %p411 = pneg %p64
        %p412 = pneg %p61
        %p413 = scmp.lt.s32.totalorder %s33, 1
        %s414 = scalar_select %p413, %s33, 1
        %p415 = scmp.lt.s32.totalorder %s34, 0
        %s416 = scalar_select %p415, %s34, 0
        %s417 = sadd.s32 %s416, %s414
        %s418 = smul.addr %s417, 8
        %s419 = scalar_lea.vmem %s1, %s418
        %p420 = pneg %p92
        %p421 = pneg %p89
        %p422 = scmp.lt.s32.totalorder %s33, 1
        %s423 = scalar_select %p422, %s33, 1
        %p424 = scmp.lt.s32.totalorder %s34, 0
        %s425 = scalar_select %p424, %s34, 0
        %s426 = sadd.s32 %s425, %s423
        %s427 = smul.addr %s426, 8
        %s428 = scalar_lea.vmem %s2, %s427
        %p429 = pneg %p120
        %p430 = pneg %p117
        %p431 = pneg %p141
        %p432 = pneg %p138
        %p433 = pneg %p162
        %p434 = pneg %p159
        %p435 = pneg %p183
        %p436 = pneg %p180
        %p437 = pneg %p204
        %p438 = pneg %p201
        %p439 = pneg %p225
        %p440 = pneg %p222
        %p441 = pneg %p246
        %p442 = pneg %p243
        %p443 = pneg %p274
        %p444 = pneg %p271
        %s445 = sand.u32 %s261, 1
        %s446 = scalar_lea.sflag [#allocation3], %s445
        %s447 = sand.u32 %s261, 1
        %s448 = smul.addr %s447, 16
        %s449 = scalar_lea.vmem [#allocation2], %s448
        %p450 = pneg %p302
        %p451 = pneg %p299
        %s452 = sand.u32 %s29, 1
        %s453 = scalar_lea.sflag [#allocation5], %s452
        %s454 = sand.u32 %s289, 1
        %s455 = smul.addr %s454, 16
        %s456 = scalar_lea.vmem [#allocation4], %s455
        %p457 = pneg %p330
        %p458 = pneg %p327
        %s459 = sand.u32 %s29, 1
        %s460 = scalar_lea.sflag [#allocation5], %s459
        %s461 = sand.u32 %s317, 1
        %s462 = smul.addr %s461, 16
        %s463 = scalar_lea.vmem [#allocation6], %s462
        %p464 = scmp.lt.s32.totalorder %s33, 1
        %s465 = scalar_select %p464, %s33, 1
        %p466 = scmp.lt.s32.totalorder %s34, 0
        %s467 = scalar_select %p466, %s34, 0
        %s468 = sadd.s32 %s467, %s465
        %s469 = smul.addr %s468, 8
        %s470 = scalar_lea.vmem %s0, %s469
        %p471 = scmp.lt.s32.totalorder %s33, 1
        %s472 = scalar_select %p471, %s33, 1
        %p473 = scmp.lt.s32.totalorder %s34, 0
        %s474 = scalar_select %p473, %s34, 0
        %s475 = sadd.s32 %s474, %s472
        %s476 = smul.addr %s475, 8
        %s477 = scalar_lea.vmem %s1, %s476
        %p478 = scmp.lt.s32.totalorder %s33, 1
        %s479 = scalar_select %p478, %s33, 1
        %p480 = scmp.lt.s32.totalorder %s34, 0
        %s481 = scalar_select %p480, %s34, 0
        %s482 = sadd.s32 %s481, %s479
        %s483 = smul.addr %s482, 8
        %s484 = scalar_lea.vmem %s2, %s483
        %v486 = vld [vmem:[%s470] sm:$0xff]
        %v487 = vpack.c.bf16 %v486, %v486
        %v488 = vld [vmem:[%s3] sm:$0xf]
        %v489 = vld [vmem:[%s3 + $0x4] sm:$0xf]
        %v490 = vld [vmem:[%s3 + $0x8] sm:$0xf]
        %v491 = vld [vmem:[%s3 + $0xc] sm:$0xf]
        %v492 = vld [vmem:[%s3 + $0x10] sm:$0xf]
        %v493 = vld [vmem:[%s3 + $0x14] sm:$0xf]
        %v494 = vld [vmem:[%s3 + $0x18] sm:$0xf]
        %v495 = vld [vmem:[%s3 + $0x1c] sm:$0xf]
        %v496 = vld [vmem:[%s3 + $0x20] sm:$0xf]
        %v497 = vld [vmem:[%s3 + $0x24] sm:$0xf]
        %v498 = vld [vmem:[%s3 + $0x28] sm:$0xf]
        %v499 = vld [vmem:[%s3 + $0x2c] sm:$0xf]
        %v500 = vld [vmem:[%s3 + $0x30] sm:$0xf]
        %v501 = vld [vmem:[%s3 + $0x34] sm:$0xf]
        %v502 = vld [vmem:[%s3 + $0x38] sm:$0xf]
        %v503 = vld [vmem:[%s3 + $0x3c] sm:$0xf]
        %v504 = vld [vmem:[%s4] sm:$0x1]
        %v505 = vld [vmem:[%s4 + $0x1] sm:$0x1]
        %v506 = vld [vmem:[%s4 + $0x2] sm:$0x1]
        %v507 = vld [vmem:[%s4 + $0x3] sm:$0x1]
        %v512 = vlaneseq
        %v513 = vshrl.u32 %v512, 7
        %v514 = vsub.s32 0, %v513
        %v515 = vrot.slane %v504, %v514
        %v516 = vlaneseq
        %v517 = vshrl.u32 %v516, 7
        %v518 = vsub.s32 0, %v517
        %v519 = vrot.slane %v505, %v518
        %v520 = vlaneseq
        %v521 = vshrl.u32 %v520, 7
        %v522 = vsub.s32 0, %v521
        %v523 = vrot.slane %v506, %v522
        %v524 = vlaneseq
        %v525 = vshrl.u32 %v524, 7
        %v526 = vsub.s32 0, %v525
        %v527 = vrot.slane %v507, %v526
        %v536 = vunpack.c.l.b16 %v488
        %v537 = vunpack.c.l.b16 %v489
        %v538 = vunpack.c.l.b16 %v490
        %v539 = vunpack.c.l.b16 %v491
        %v540 = vpack.c.b16 %v537, %v536
        %v541 = vpack.c.b16 %v539, %v538
        %vm544 = vcmask 261120
        %v546 = vsel %vm544, %v487, 0
        %548 = vmatprep.subr.bf16.mxu0 0
        %549 = vmatpush1.bf16.msra.mxu0 %v540
        %550 = vmatprep.subr.bf16.mxu0 0
        %551 = vmatpush1.bf16.msra.mxu0 %v541
        %552 = vmatprep.subr.bf16.mxu0 0
        %553 = vmatpush1.bf16.msra.mxu0 0
        %554 = vmatprep.subr.bf16.mxu0 0
        %555 = vmatpush1.bf16.msra.mxu0 0
        %556 = vmatprep.subr.bf16.mxu0 0
        %557 = vmatpush1.bf16.msra.mxu0 0
        %558 = vmatprep.subr.bf16.mxu0 0
        %559 = vmatpush1.bf16.msra.mxu0 0
        %560 = vmatprep.subr.bf16.mxu0 0
        %561 = vmatpush1.bf16.msra.mxu0 0
        %562 = vmatprep.subr.bf16.mxu0 0
        %563 = vmatpush1.bf16.msra.mxu0 0
        %564 = vmatprep.subr.bf16.mxu0 0
        %565 = vmatpush1.bf16.msra.mxu0 0
        %566 = vmatprep.subr.bf16.mxu0 0
        %567 = vmatpush1.bf16.msra.mxu0 0
        %568 = vmatprep.subr.bf16.mxu0 0
        %569 = vmatpush1.bf16.msra.mxu0 0
        %570 = vmatprep.subr.bf16.mxu0 0
        %571 = vmatpush1.bf16.msra.mxu0 0
        %572 = vmatprep.subr.bf16.mxu0 0
        %573 = vmatpush1.bf16.msra.mxu0 0
        %574 = vmatprep.subr.bf16.mxu0 0
        %575 = vmatpush1.bf16.msra.mxu0 0
        %576 = vmatprep.subr.bf16.mxu0 0
        %577 = vmatpush1.bf16.msra.mxu0 0
        %578 = vmatprep.subr.bf16.mxu0 0
        %579 = vmatpush1.bf16.msra.mxu0 0
        %580 = vmatprep.mubr.bf16.mxu0 0
        %581 = vmatmul.mubr.bf16.gmra.mrb[0].mxu0 %v546
        %v582 = vpop.f32.mrb[0].mxu0
        %v583 = vadd.f32 %v515, %v582
        %v584 = vpop.f32.mrb[0].mxu0
        %v585 = vpop.f32.mrb[0].mxu0
        %v586 = vpop.f32.mrb[0].mxu0
        %587 = vdwg.mxu0
        %v592 = vunpack.c.l.b16 %v492
        %v593 = vunpack.c.l.b16 %v493
        %v594 = vunpack.c.l.b16 %v494
        %v595 = vunpack.c.l.b16 %v495
        %v596 = vpack.c.b16 %v593, %v592
        %v597 = vpack.c.b16 %v595, %v594
        %600 = vmatprep.subr.bf16.mxu0 0
        %601 = vmatpush1.bf16.msra.mxu0 %v596
        %602 = vmatprep.subr.bf16.mxu0 0
        %603 = vmatpush1.bf16.msra.mxu0 %v597
        %604 = vmatprep.subr.bf16.mxu0 0
        %605 = vmatpush1.bf16.msra.mxu0 0
        %606 = vmatprep.subr.bf16.mxu0 0
        %607 = vmatpush1.bf16.msra.mxu0 0
        %608 = vmatprep.subr.bf16.mxu0 0
        %609 = vmatpush1.bf16.msra.mxu0 0
        %610 = vmatprep.subr.bf16.mxu0 0
        %611 = vmatpush1.bf16.msra.mxu0 0
        %612 = vmatprep.subr.bf16.mxu0 0
        %613 = vmatpush1.bf16.msra.mxu0 0
        %614 = vmatprep.subr.bf16.mxu0 0
        %615 = vmatpush1.bf16.msra.mxu0 0
        %616 = vmatprep.subr.bf16.mxu0 0
        %617 = vmatpush1.bf16.msra.mxu0 0
        %618 = vmatprep.subr.bf16.mxu0 0
        %619 = vmatpush1.bf16.msra.mxu0 0
        %620 = vmatprep.subr.bf16.mxu0 0
        %621 = vmatpush1.bf16.msra.mxu0 0
        %622 = vmatprep.subr.bf16.mxu0 0
        %623 = vmatpush1.bf16.msra.mxu0 0
        %624 = vmatprep.subr.bf16.mxu0 0
        %625 = vmatpush1.bf16.msra.mxu0 0
        %626 = vmatprep.subr.bf16.mxu0 0
        %627 = vmatpush1.bf16.msra.mxu0 0
        %628 = vmatprep.subr.bf16.mxu0 0
        %629 = vmatpush1.bf16.msra.mxu0 0
        %630 = vmatprep.subr.bf16.mxu0 0
        %631 = vmatpush1.bf16.msra.mxu0 0
        %632 = vmatprep.mubr.bf16.mxu0 0
        %633 = vmatmul.mubr.bf16.gmra.mrb[0].mxu0 %v546
        %v634 = vpop.f32.mrb[0].mxu0
        %v635 = vadd.f32 %v519, %v634
        %v636 = vpop.f32.mrb[0].mxu0
        %v637 = vpop.f32.mrb[0].mxu0
        %v638 = vpop.f32.mrb[0].mxu0
        %639 = vdwg.mxu0
        %v644 = vunpack.c.l.b16 %v496
        %v645 = vunpack.c.l.b16 %v497
        %v646 = vunpack.c.l.b16 %v498
        %v647 = vunpack.c.l.b16 %v499
        %v648 = vpack.c.b16 %v645, %v644
        %v649 = vpack.c.b16 %v647, %v646
        %652 = vmatprep.subr.bf16.mxu0 0
        %653 = vmatpush1.bf16.msra.mxu0 %v648
        %654 = vmatprep.subr.bf16.mxu0 0
        %655 = vmatpush1.bf16.msra.mxu0 %v649
        %656 = vmatprep.subr.bf16.mxu0 0
        %657 = vmatpush1.bf16.msra.mxu0 0
        %658 = vmatprep.subr.bf16.mxu0 0
        %659 = vmatpush1.bf16.msra.mxu0 0
        %660 = vmatprep.subr.bf16.mxu0 0
        %661 = vmatpush1.bf16.msra.mxu0 0
        %662 = vmatprep.subr.bf16.mxu0 0
        %663 = vmatpush1.bf16.msra.mxu0 0
        %664 = vmatprep.subr.bf16.mxu0 0
        %665 = vmatpush1.bf16.msra.mxu0 0
        %666 = vmatprep.subr.bf16.mxu0 0
        %667 = vmatpush1.bf16.msra.mxu0 0
        %668 = vmatprep.subr.bf16.mxu0 0
        %669 = vmatpush1.bf16.msra.mxu0 0
        %670 = vmatprep.subr.bf16.mxu0 0
        %671 = vmatpush1.bf16.msra.mxu0 0
        %672 = vmatprep.subr.bf16.mxu0 0
        %673 = vmatpush1.bf16.msra.mxu0 0
        %674 = vmatprep.subr.bf16.mxu0 0
        %675 = vmatpush1.bf16.msra.mxu0 0
        %676 = vmatprep.subr.bf16.mxu0 0
        %677 = vmatpush1.bf16.msra.mxu0 0
        %678 = vmatprep.subr.bf16.mxu0 0
        %679 = vmatpush1.bf16.msra.mxu0 0
        %680 = vmatprep.subr.bf16.mxu0 0
        %681 = vmatpush1.bf16.msra.mxu0 0
        %682 = vmatprep.subr.bf16.mxu0 0
        %683 = vmatpush1.bf16.msra.mxu0 0
        %684 = vmatprep.mubr.bf16.mxu0 0
        %685 = vmatmul.mubr.bf16.gmra.mrb[0].mxu0 %v546
        %v686 = vpop.f32.mrb[0].mxu0
        %v687 = vadd.f32 %v523, %v686
        %v688 = vpop.f32.mrb[0].mxu0
        %v689 = vpop.f32.mrb[0].mxu0
        %v690 = vpop.f32.mrb[0].mxu0
        %691 = vdwg.mxu0
        %v696 = vunpack.c.l.b16 %v500
        %v697 = vunpack.c.l.b16 %v501
        %v698 = vunpack.c.l.b16 %v502
        %v699 = vunpack.c.l.b16 %v503
        %v700 = vpack.c.b16 %v697, %v696
        %v701 = vpack.c.b16 %v699, %v698
        %704 = vmatprep.subr.bf16.mxu0 0
        %705 = vmatpush1.bf16.msra.mxu0 %v700
        %706 = vmatprep.subr.bf16.mxu0 0
        %707 = vmatpush1.bf16.msra.mxu0 %v701
        %708 = vmatprep.subr.bf16.mxu0 0
        %709 = vmatpush1.bf16.msra.mxu0 0
        %710 = vmatprep.subr.bf16.mxu0 0
        %711 = vmatpush1.bf16.msra.mxu0 0
        %712 = vmatprep.subr.bf16.mxu0 0
        %713 = vmatpush1.bf16.msra.mxu0 0
        %714 = vmatprep.subr.bf16.mxu0 0
        %715 = vmatpush1.bf16.msra.mxu0 0
        %716 = vmatprep.subr.bf16.mxu0 0
        %717 = vmatpush1.bf16.msra.mxu0 0
        %718 = vmatprep.subr.bf16.mxu0 0
        %719 = vmatpush1.bf16.msra.mxu0 0
        %720 = vmatprep.subr.bf16.mxu0 0
        %721 = vmatpush1.bf16.msra.mxu0 0
        %722 = vmatprep.subr.bf16.mxu0 0
        %723 = vmatpush1.bf16.msra.mxu0 0
        %724 = vmatprep.subr.bf16.mxu0 0
        %725 = vmatpush1.bf16.msra.mxu0 0
        %726 = vmatprep.subr.bf16.mxu0 0
        %727 = vmatpush1.bf16.msra.mxu0 0
        %728 = vmatprep.subr.bf16.mxu0 0
        %729 = vmatpush1.bf16.msra.mxu0 0
        %730 = vmatprep.subr.bf16.mxu0 0
        %731 = vmatpush1.bf16.msra.mxu0 0
        %732 = vmatprep.subr.bf16.mxu0 0
        %733 = vmatpush1.bf16.msra.mxu0 0
        %734 = vmatprep.subr.bf16.mxu0 0
        %735 = vmatpush1.bf16.msra.mxu0 0
        %736 = vmatprep.mubr.bf16.mxu0 0
        %737 = vmatmul.mubr.bf16.gmra.mrb[0].mxu0 %v546
        %v738 = vpop.f32.mrb[0].mxu0
        %v739 = vadd.f32 %v527, %v738
        %v740 = vpop.f32.mrb[0].mxu0
        %v741 = vpop.f32.mrb[0].mxu0
        %v742 = vpop.f32.mrb[0].mxu0
        %743 = vdwg.mxu0
        %v744 = vmul.f32 %v583, 0.35355338
        %v745 = vmul.f32 %v635, 0.35355338
        %v746 = vmul.f32 %v687, 0.35355338
        %v747 = vmul.f32 %v739, 0.35355338
        %v748 = vpack.c.bf16 %v744, %v744
        %v749 = vpack.c.bf16 %v745, %v745
        %v750 = vpack.c.bf16 %v746, %v746
        %v751 = vpack.c.bf16 %v747, %v747
        %vm752 = vcmask 60416
        %753 = vst.msk [vmem:[%s449] sm:$0xf] %vm752, %v748
        %754 = vst.msk [vmem:[%s449 + $0x4] sm:$0xf] %vm752, %v749
        %755 = vst.msk [vmem:[%s449 + $0x8] sm:$0xf] %vm752, %v750
        %756 = vst.msk [vmem:[%s449 + $0xc] sm:$0xf] %vm752, %v751
        %v757 = vld [vmem:[%s477] sm:$0xff]
        %v758 = vpack.c.bf16 %v757, %v757
        %v759 = vld [vmem:[%s5] sm:$0xf]
        %v760 = vld [vmem:[%s5 + $0x4] sm:$0xf]
        %v761 = vld [vmem:[%s5 + $0x8] sm:$0xf]
        %v762 = vld [vmem:[%s5 + $0xc] sm:$0xf]
        %v763 = vld [vmem:[%s5 + $0x10] sm:$0xf]
        %v764 = vld [vmem:[%s5 + $0x14] sm:$0xf]
        %v765 = vld [vmem:[%s5 + $0x18] sm:$0xf]
        %v766 = vld [vmem:[%s5 + $0x1c] sm:$0xf]
        %v767 = vld [vmem:[%s5 + $0x20] sm:$0xf]
        %v768 = vld [vmem:[%s5 + $0x24] sm:$0xf]
        %v769 = vld [vmem:[%s5 + $0x28] sm:$0xf]
        %v770 = vld [vmem:[%s5 + $0x2c] sm:$0xf]
        %v771 = vld [vmem:[%s5 + $0x30] sm:$0xf]
        %v772 = vld [vmem:[%s5 + $0x34] sm:$0xf]
        %v773 = vld [vmem:[%s5 + $0x38] sm:$0xf]
        %v774 = vld [vmem:[%s5 + $0x3c] sm:$0xf]
        %v775 = vld [vmem:[%s6] sm:$0x1]
        %v776 = vld [vmem:[%s6 + $0x1] sm:$0x1]
        %v777 = vld [vmem:[%s6 + $0x2] sm:$0x1]
        %v778 = vld [vmem:[%s6 + $0x3] sm:$0x1]
        %v783 = vlaneseq
        %v784 = vshrl.u32 %v783, 7
        %v785 = vsub.s32 0, %v784
        %v786 = vrot.slane %v775, %v785
        %v787 = vlaneseq
        %v788 = vshrl.u32 %v787, 7
        %v789 = vsub.s32 0, %v788
        %v790 = vrot.slane %v776, %v789
        %v791 = vlaneseq
        %v792 = vshrl.u32 %v791, 7
        %v793 = vsub.s32 0, %v792
        %v794 = vrot.slane %v777, %v793
        %v795 = vlaneseq
        %v796 = vshrl.u32 %v795, 7
        %v797 = vsub.s32 0, %v796
        %v798 = vrot.slane %v778, %v797
        %v807 = vunpack.c.l.b16 %v759
        %v808 = vunpack.c.l.b16 %v760
        %v809 = vunpack.c.l.b16 %v761
        %v810 = vunpack.c.l.b16 %v762
        %v811 = vpack.c.b16 %v808, %v807
        %v812 = vpack.c.b16 %v810, %v809
        %v816 = vsel %vm544, %v758, 0
        %818 = vmatprep.subr.bf16.mxu0 0
        %819 = vmatpush1.bf16.msra.mxu0 %v811
        %820 = vmatprep.subr.bf16.mxu0 0
        %821 = vmatpush1.bf16.msra.mxu0 %v812
        %822 = vmatprep.subr.bf16.mxu0 0
        %823 = vmatpush1.bf16.msra.mxu0 0
        %824 = vmatprep.subr.bf16.mxu0 0
        %825 = vmatpush1.bf16.msra.mxu0 0
        %826 = vmatprep.subr.bf16.mxu0 0
        %827 = vmatpush1.bf16.msra.mxu0 0
        %828 = vmatprep.subr.bf16.mxu0 0
        %829 = vmatpush1.bf16.msra.mxu0 0
        %830 = vmatprep.subr.bf16.mxu0 0
        %831 = vmatpush1.bf16.msra.mxu0 0
        %832 = vmatprep.subr.bf16.mxu0 0
        %833 = vmatpush1.bf16.msra.mxu0 0
        %834 = vmatprep.subr.bf16.mxu0 0
        %835 = vmatpush1.bf16.msra.mxu0 0
        %836 = vmatprep.subr.bf16.mxu0 0
        %837 = vmatpush1.bf16.msra.mxu0 0
        %838 = vmatprep.subr.bf16.mxu0 0
        %839 = vmatpush1.bf16.msra.mxu0 0
        %840 = vmatprep.subr.bf16.mxu0 0
        %841 = vmatpush1.bf16.msra.mxu0 0
        %842 = vmatprep.subr.bf16.mxu0 0
        %843 = vmatpush1.bf16.msra.mxu0 0
        %844 = vmatprep.subr.bf16.mxu0 0
        %845 = vmatpush1.bf16.msra.mxu0 0
        %846 = vmatprep.subr.bf16.mxu0 0
        %847 = vmatpush1.bf16.msra.mxu0 0
        %848 = vmatprep.subr.bf16.mxu0 0
        %849 = vmatpush1.bf16.msra.mxu0 0
        %850 = vmatprep.mubr.bf16.mxu0 0
        %851 = vmatmul.mubr.bf16.gmra.mrb[0].mxu0 %v816
        %v852 = vpop.f32.mrb[0].mxu0
        %v853 = vadd.f32 %v786, %v852
        %v854 = vpop.f32.mrb[0].mxu0
        %v855 = vpop.f32.mrb[0].mxu0
        %v856 = vpop.f32.mrb[0].mxu0
        %857 = vdwg.mxu0
        %v862 = vunpack.c.l.b16 %v763
        %v863 = vunpack.c.l.b16 %v764
        %v864 = vunpack.c.l.b16 %v765
        %v865 = vunpack.c.l.b16 %v766
        %v866 = vpack.c.b16 %v863, %v862
        %v867 = vpack.c.b16 %v865, %v864
        %870 = vmatprep.subr.bf16.mxu0 0
        %871 = vmatpush1.bf16.msra.mxu0 %v866
        %872 = vmatprep.subr.bf16.mxu0 0
        %873 = vmatpush1.bf16.msra.mxu0 %v867
        %874 = vmatprep.subr.bf16.mxu0 0
        %875 = vmatpush1.bf16.msra.mxu0 0
        %876 = vmatprep.subr.bf16.mxu0 0
        %877 = vmatpush1.bf16.msra.mxu0 0
        %878 = vmatprep.subr.bf16.mxu0 0
        %879 = vmatpush1.bf16.msra.mxu0 0
        %880 = vmatprep.subr.bf16.mxu0 0
        %881 = vmatpush1.bf16.msra.mxu0 0
        %882 = vmatprep.subr.bf16.mxu0 0
        %883 = vmatpush1.bf16.msra.mxu0 0
        %884 = vmatprep.subr.bf16.mxu0 0
        %885 = vmatpush1.bf16.msra.mxu0 0
        %886 = vmatprep.subr.bf16.mxu0 0
        %887 = vmatpush1.bf16.msra.mxu0 0
        %888 = vmatprep.subr.bf16.mxu0 0
        %889 = vmatpush1.bf16.msra.mxu0 0
        %890 = vmatprep.subr.bf16.mxu0 0
        %891 = vmatpush1.bf16.msra.mxu0 0
        %892 = vmatprep.subr.bf16.mxu0 0
        %893 = vmatpush1.bf16.msra.mxu0 0
        %894 = vmatprep.subr.bf16.mxu0 0
        %895 = vmatpush1.bf16.msra.mxu0 0
        %896 = vmatprep.subr.bf16.mxu0 0
        %897 = vmatpush1.bf16.msra.mxu0 0
        %898 = vmatprep.subr.bf16.mxu0 0
        %899 = vmatpush1.bf16.msra.mxu0 0
        %900 = vmatprep.subr.bf16.mxu0 0
        %901 = vmatpush1.bf16.msra.mxu0 0
        %902 = vmatprep.mubr.bf16.mxu0 0
        %903 = vmatmul.mubr.bf16.gmra.mrb[0].mxu0 %v816
        %v904 = vpop.f32.mrb[0].mxu0
        %v905 = vadd.f32 %v790, %v904
        %v906 = vpop.f32.mrb[0].mxu0
        %v907 = vpop.f32.mrb[0].mxu0
        %v908 = vpop.f32.mrb[0].mxu0
        %909 = vdwg.mxu0
        %v914 = vunpack.c.l.b16 %v767
        %v915 = vunpack.c.l.b16 %v768
        %v916 = vunpack.c.l.b16 %v769
        %v917 = vunpack.c.l.b16 %v770
        %v918 = vpack.c.b16 %v915, %v914
        %v919 = vpack.c.b16 %v917, %v916
        %922 = vmatprep.subr.bf16.mxu0 0
        %923 = vmatpush1.bf16.msra.mxu0 %v918
        %924 = vmatprep.subr.bf16.mxu0 0
        %925 = vmatpush1.bf16.msra.mxu0 %v919
        %926 = vmatprep.subr.bf16.mxu0 0
        %927 = vmatpush1.bf16.msra.mxu0 0
        %928 = vmatprep.subr.bf16.mxu0 0
        %929 = vmatpush1.bf16.msra.mxu0 0
        %930 = vmatprep.subr.bf16.mxu0 0
        %931 = vmatpush1.bf16.msra.mxu0 0
        %932 = vmatprep.subr.bf16.mxu0 0
        %933 = vmatpush1.bf16.msra.mxu0 0
        %934 = vmatprep.subr.bf16.mxu0 0
        %935 = vmatpush1.bf16.msra.mxu0 0
        %936 = vmatprep.subr.bf16.mxu0 0
        %937 = vmatpush1.bf16.msra.mxu0 0
        %938 = vmatprep.subr.bf16.mxu0 0
        %939 = vmatpush1.bf16.msra.mxu0 0
        %940 = vmatprep.subr.bf16.mxu0 0
        %941 = vmatpush1.bf16.msra.mxu0 0
        %942 = vmatprep.subr.bf16.mxu0 0
        %943 = vmatpush1.bf16.msra.mxu0 0
        %944 = vmatprep.subr.bf16.mxu0 0
        %945 = vmatpush1.bf16.msra.mxu0 0
        %946 = vmatprep.subr.bf16.mxu0 0
        %947 = vmatpush1.bf16.msra.mxu0 0
        %948 = vmatprep.subr.bf16.mxu0 0
        %949 = vmatpush1.bf16.msra.mxu0 0
        %950 = vmatprep.subr.bf16.mxu0 0
        %951 = vmatpush1.bf16.msra.mxu0 0
        %952 = vmatprep.subr.bf16.mxu0 0
        %953 = vmatpush1.bf16.msra.mxu0 0
        %954 = vmatprep.mubr.bf16.mxu0 0
        %955 = vmatmul.mubr.bf16.gmra.mrb[0].mxu0 %v816
        %v956 = vpop.f32.mrb[0].mxu0
        %v957 = vadd.f32 %v794, %v956
        %v958 = vpop.f32.mrb[0].mxu0
        %v959 = vpop.f32.mrb[0].mxu0
        %v960 = vpop.f32.mrb[0].mxu0
        %961 = vdwg.mxu0
        %v966 = vunpack.c.l.b16 %v771
        %v967 = vunpack.c.l.b16 %v772
        %v968 = vunpack.c.l.b16 %v773
        %v969 = vunpack.c.l.b16 %v774
        %v970 = vpack.c.b16 %v967, %v966
        %v971 = vpack.c.b16 %v969, %v968
        %974 = vmatprep.subr.bf16.mxu0 0
        %975 = vmatpush1.bf16.msra.mxu0 %v970
        %976 = vmatprep.subr.bf16.mxu0 0
        %977 = vmatpush1.bf16.msra.mxu0 %v971
        %978 = vmatprep.subr.bf16.mxu0 0
        %979 = vmatpush1.bf16.msra.mxu0 0
        %980 = vmatprep.subr.bf16.mxu0 0
        %981 = vmatpush1.bf16.msra.mxu0 0
        %982 = vmatprep.subr.bf16.mxu0 0
        %983 = vmatpush1.bf16.msra.mxu0 0
        %984 = vmatprep.subr.bf16.mxu0 0
        %985 = vmatpush1.bf16.msra.mxu0 0
        %986 = vmatprep.subr.bf16.mxu0 0
        %987 = vmatpush1.bf16.msra.mxu0 0
        %988 = vmatprep.subr.bf16.mxu0 0
        %989 = vmatpush1.bf16.msra.mxu0 0
        %990 = vmatprep.subr.bf16.mxu0 0
        %991 = vmatpush1.bf16.msra.mxu0 0
        %992 = vmatprep.subr.bf16.mxu0 0
        %993 = vmatpush1.bf16.msra.mxu0 0
        %994 = vmatprep.subr.bf16.mxu0 0
        %995 = vmatpush1.bf16.msra.mxu0 0
        %996 = vmatprep.subr.bf16.mxu0 0
        %997 = vmatpush1.bf16.msra.mxu0 0
        %998 = vmatprep.subr.bf16.mxu0 0
        %999 = vmatpush1.bf16.msra.mxu0 0
        %1000 = vmatprep.subr.bf16.mxu0 0
        %1001 = vmatpush1.bf16.msra.mxu0 0
        %1002 = vmatprep.subr.bf16.mxu0 0
        %1003 = vmatpush1.bf16.msra.mxu0 0
        %1004 = vmatprep.subr.bf16.mxu0 0
        %1005 = vmatpush1.bf16.msra.mxu0 0
        %1006 = vmatprep.mubr.bf16.mxu0 0
        %1007 = vmatmul.mubr.bf16.gmra.mrb[0].mxu0 %v816
        %v1008 = vpop.f32.mrb[0].mxu0
        %v1009 = vadd.f32 %v798, %v1008
        %v1010 = vpop.f32.mrb[0].mxu0
        %v1011 = vpop.f32.mrb[0].mxu0
        %v1012 = vpop.f32.mrb[0].mxu0
        %1013 = vdwg.mxu0
        %v1014 = vpack.c.bf16 %v853, %v853
        %v1015 = vpack.c.bf16 %v905, %v905
        %v1016 = vpack.c.bf16 %v957, %v957
        %v1017 = vpack.c.bf16 %v1009, %v1009
        %1018 = vst.msk [vmem:[%s456] sm:$0xf] %vm752, %v1014
        %1019 = vst.msk [vmem:[%s456 + $0x4] sm:$0xf] %vm752, %v1015
        %1020 = vst.msk [vmem:[%s456 + $0x8] sm:$0xf] %vm752, %v1016
        %1021 = vst.msk [vmem:[%s456 + $0xc] sm:$0xf] %vm752, %v1017
        %v1022 = vld [vmem:[%s484] sm:$0xff]
        %v1023 = vpack.c.bf16 %v1022, %v1022
        %v1024 = vld [vmem:[%s7] sm:$0xf]
        %v1025 = vld [vmem:[%s7 + $0x4] sm:$0xf]
        %v1026 = vld [vmem:[%s7 + $0x8] sm:$0xf]
        %v1027 = vld [vmem:[%s7 + $0xc] sm:$0xf]
        %v1028 = vld [vmem:[%s7 + $0x10] sm:$0xf]
        %v1029 = vld [vmem:[%s7 + $0x14] sm:$0xf]
        %v1030 = vld [vmem:[%s7 + $0x18] sm:$0xf]
        %v1031 = vld [vmem:[%s7 + $0x1c] sm:$0xf]
        %v1032 = vld [vmem:[%s7 + $0x20] sm:$0xf]
        %v1033 = vld [vmem:[%s7 + $0x24] sm:$0xf]
        %v1034 = vld [vmem:[%s7 + $0x28] sm:$0xf]
        %v1035 = vld [vmem:[%s7 + $0x2c] sm:$0xf]
        %v1036 = vld [vmem:[%s7 + $0x30] sm:$0xf]
        %v1037 = vld [vmem:[%s7 + $0x34] sm:$0xf]
        %v1038 = vld [vmem:[%s7 + $0x38] sm:$0xf]
        %v1039 = vld [vmem:[%s7 + $0x3c] sm:$0xf]
        %v1040 = vld [vmem:[%s8] sm:$0x1]
        %v1041 = vld [vmem:[%s8 + $0x1] sm:$0x1]
        %v1042 = vld [vmem:[%s8 + $0x2] sm:$0x1]
        %v1043 = vld [vmem:[%s8 + $0x3] sm:$0x1]
        %v1048 = vlaneseq
        %v1049 = vshrl.u32 %v1048, 7
        %v1050 = vsub.s32 0, %v1049
        %v1051 = vrot.slane %v1040, %v1050
        %v1052 = vlaneseq
        %v1053 = vshrl.u32 %v1052, 7
        %v1054 = vsub.s32 0, %v1053
        %v1055 = vrot.slane %v1041, %v1054
        %v1056 = vlaneseq
        %v1057 = vshrl.u32 %v1056, 7
        %v1058 = vsub.s32 0, %v1057
        %v1059 = vrot.slane %v1042, %v1058
        %v1060 = vlaneseq
        %v1061 = vshrl.u32 %v1060, 7
        %v1062 = vsub.s32 0, %v1061
        %v1063 = vrot.slane %v1043, %v1062
        %v1072 = vunpack.c.l.b16 %v1024
        %v1073 = vunpack.c.l.b16 %v1025
        %v1074 = vunpack.c.l.b16 %v1026
        %v1075 = vunpack.c.l.b16 %v1027
        %v1076 = vpack.c.b16 %v1073, %v1072
        %v1077 = vpack.c.b16 %v1075, %v1074
        %v1081 = vsel %vm544, %v1023, 0
        %1083 = vmatprep.subr.bf16.mxu0 0
        %1084 = vmatpush1.bf16.msra.mxu0 %v1076
        %1085 = vmatprep.subr.bf16.mxu0 0
        %1086 = vmatpush1.bf16.msra.mxu0 %v1077
        %1087 = vmatprep.subr.bf16.mxu0 0
        %1088 = vmatpush1.bf16.msra.mxu0 0
        %1089 = vmatprep.subr.bf16.mxu0 0
        %1090 = vmatpush1.bf16.msra.mxu0 0
        %1091 = vmatprep.subr.bf16.mxu0 0
        %1092 = vmatpush1.bf16.msra.mxu0 0
        %1093 = vmatprep.subr.bf16.mxu0 0
        %1094 = vmatpush1.bf16.msra.mxu0 0
        %1095 = vmatprep.subr.bf16.mxu0 0
        %1096 = vmatpush1.bf16.msra.mxu0 0
        %1097 = vmatprep.subr.bf16.mxu0 0
        %1098 = vmatpush1.bf16.msra.mxu0 0
        %1099 = vmatprep.subr.bf16.mxu0 0
        %1100 = vmatpush1.bf16.msra.mxu0 0
        %1101 = vmatprep.subr.bf16.mxu0 0
        %1102 = vmatpush1.bf16.msra.mxu0 0
        %1103 = vmatprep.subr.bf16.mxu0 0
        %1104 = vmatpush1.bf16.msra.mxu0 0
        %1105 = vmatprep.subr.bf16.mxu0 0
        %1106 = vmatpush1.bf16.msra.mxu0 0
        %1107 = vmatprep.subr.bf16.mxu0 0
        %1108 = vmatpush1.bf16.msra.mxu0 0
        %1109 = vmatprep.subr.bf16.mxu0 0
        %1110 = vmatpush1.bf16.msra.mxu0 0
        %1111 = vmatprep.subr.bf16.mxu0 0
        %1112 = vmatpush1.bf16.msra.mxu0 0
        %1113 = vmatprep.subr.bf16.mxu0 0
        %1114 = vmatpush1.bf16.msra.mxu0 0
        %1115 = vmatprep.mubr.bf16.mxu0 0
        %1116 = vmatmul.mubr.bf16.gmra.mrb[0].mxu0 %v1081
        %v1117 = vpop.f32.mrb[0].mxu0
        %v1118 = vadd.f32 %v1051, %v1117
        %v1119 = vpop.f32.mrb[0].mxu0
        %v1120 = vpop.f32.mrb[0].mxu0
        %v1121 = vpop.f32.mrb[0].mxu0
        %1122 = vdwg.mxu0
        %v1127 = vunpack.c.l.b16 %v1028
        %v1128 = vunpack.c.l.b16 %v1029
        %v1129 = vunpack.c.l.b16 %v1030
        %v1130 = vunpack.c.l.b16 %v1031
        %v1131 = vpack.c.b16 %v1128, %v1127
        %v1132 = vpack.c.b16 %v1130, %v1129
        %1135 = vmatprep.subr.bf16.mxu0 0
        %1136 = vmatpush1.bf16.msra.mxu0 %v1131
        %1137 = vmatprep.subr.bf16.mxu0 0
        %1138 = vmatpush1.bf16.msra.mxu0 %v1132
        %1139 = vmatprep.subr.bf16.mxu0 0
        %1140 = vmatpush1.bf16.msra.mxu0 0
        %1141 = vmatprep.subr.bf16.mxu0 0
        %1142 = vmatpush1.bf16.msra.mxu0 0
        %1143 = vmatprep.subr.bf16.mxu0 0
        %1144 = vmatpush1.bf16.msra.mxu0 0
        %1145 = vmatprep.subr.bf16.mxu0 0
        %1146 = vmatpush1.bf16.msra.mxu0 0
        %1147 = vmatprep.subr.bf16.mxu0 0
        %1148 = vmatpush1.bf16.msra.mxu0 0
        %1149 = vmatprep.subr.bf16.mxu0 0
        %1150 = vmatpush1.bf16.msra.mxu0 0
        %1151 = vmatprep.subr.bf16.mxu0 0
        %1152 = vmatpush1.bf16.msra.mxu0 0
        %1153 = vmatprep.subr.bf16.mxu0 0
        %1154 = vmatpush1.bf16.msra.mxu0 0
        %1155 = vmatprep.subr.bf16.mxu0 0
        %1156 = vmatpush1.bf16.msra.mxu0 0
        %1157 = vmatprep.subr.bf16.mxu0 0
        %1158 = vmatpush1.bf16.msra.mxu0 0
        %1159 = vmatprep.subr.bf16.mxu0 0
        %1160 = vmatpush1.bf16.msra.mxu0 0
        %1161 = vmatprep.subr.bf16.mxu0 0
        %1162 = vmatpush1.bf16.msra.mxu0 0
        %1163 = vmatprep.subr.bf16.mxu0 0
        %1164 = vmatpush1.bf16.msra.mxu0 0
        %1165 = vmatprep.subr.bf16.mxu0 0
        %1166 = vmatpush1.bf16.msra.mxu0 0
        %1167 = vmatprep.mubr.bf16.mxu0 0
        %1168 = vmatmul.mubr.bf16.gmra.mrb[0].mxu0 %v1081
        %v1169 = vpop.f32.mrb[0].mxu0
        %v1170 = vadd.f32 %v1055, %v1169
        %v1171 = vpop.f32.mrb[0].mxu0
        %v1172 = vpop.f32.mrb[0].mxu0
        %v1173 = vpop.f32.mrb[0].mxu0
        %1174 = vdwg.mxu0
        %v1179 = vunpack.c.l.b16 %v1032
        %v1180 = vunpack.c.l.b16 %v1033
        %v1181 = vunpack.c.l.b16 %v1034
        %v1182 = vunpack.c.l.b16 %v1035
        %v1183 = vpack.c.b16 %v1180, %v1179
        %v1184 = vpack.c.b16 %v1182, %v1181
        %1187 = vmatprep.subr.bf16.mxu0 0
        %1188 = vmatpush1.bf16.msra.mxu0 %v1183
        %1189 = vmatprep.subr.bf16.mxu0 0
        %1190 = vmatpush1.bf16.msra.mxu0 %v1184
        %1191 = vmatprep.subr.bf16.mxu0 0
        %1192 = vmatpush1.bf16.msra.mxu0 0
        %1193 = vmatprep.subr.bf16.mxu0 0
        %1194 = vmatpush1.bf16.msra.mxu0 0
        %1195 = vmatprep.subr.bf16.mxu0 0
        %1196 = vmatpush1.bf16.msra.mxu0 0
        %1197 = vmatprep.subr.bf16.mxu0 0
        %1198 = vmatpush1.bf16.msra.mxu0 0
        %1199 = vmatprep.subr.bf16.mxu0 0
        %1200 = vmatpush1.bf16.msra.mxu0 0
        %1201 = vmatprep.subr.bf16.mxu0 0
        %1202 = vmatpush1.bf16.msra.mxu0 0
        %1203 = vmatprep.subr.bf16.mxu0 0
        %1204 = vmatpush1.bf16.msra.mxu0 0
        %1205 = vmatprep.subr.bf16.mxu0 0
        %1206 = vmatpush1.bf16.msra.mxu0 0
        %1207 = vmatprep.subr.bf16.mxu0 0
        %1208 = vmatpush1.bf16.msra.mxu0 0
        %1209 = vmatprep.subr.bf16.mxu0 0
        %1210 = vmatpush1.bf16.msra.mxu0 0
        %1211 = vmatprep.subr.bf16.mxu0 0
        %1212 = vmatpush1.bf16.msra.mxu0 0
        %1213 = vmatprep.subr.bf16.mxu0 0
        %1214 = vmatpush1.bf16.msra.mxu0 0
        %1215 = vmatprep.subr.bf16.mxu0 0
        %1216 = vmatpush1.bf16.msra.mxu0 0
        %1217 = vmatprep.subr.bf16.mxu0 0
        %1218 = vmatpush1.bf16.msra.mxu0 0
        %1219 = vmatprep.mubr.bf16.mxu0 0
        %1220 = vmatmul.mubr.bf16.gmra.mrb[0].mxu0 %v1081
        %v1221 = vpop.f32.mrb[0].mxu0
        %v1222 = vadd.f32 %v1059, %v1221
        %v1223 = vpop.f32.mrb[0].mxu0
        %v1224 = vpop.f32.mrb[0].mxu0
        %v1225 = vpop.f32.mrb[0].mxu0
        %1226 = vdwg.mxu0
        %v1231 = vunpack.c.l.b16 %v1036
        %v1232 = vunpack.c.l.b16 %v1037
        %v1233 = vunpack.c.l.b16 %v1038
        %v1234 = vunpack.c.l.b16 %v1039
        %v1235 = vpack.c.b16 %v1232, %v1231
        %v1236 = vpack.c.b16 %v1234, %v1233
        %1239 = vmatprep.subr.bf16.mxu0 0
        %1240 = vmatpush1.bf16.msra.mxu0 %v1235
        %1241 = vmatprep.subr.bf16.mxu0 0
        %1242 = vmatpush1.bf16.msra.mxu0 %v1236
        %1243 = vmatprep.subr.bf16.mxu0 0
        %1244 = vmatpush1.bf16.msra.mxu0 0
        %1245 = vmatprep.subr.bf16.mxu0 0
        %1246 = vmatpush1.bf16.msra.mxu0 0
        %1247 = vmatprep.subr.bf16.mxu0 0
        %1248 = vmatpush1.bf16.msra.mxu0 0
        %1249 = vmatprep.subr.bf16.mxu0 0
        %1250 = vmatpush1.bf16.msra.mxu0 0
        %1251 = vmatprep.subr.bf16.mxu0 0
        %1252 = vmatpush1.bf16.msra.mxu0 0
        %1253 = vmatprep.subr.bf16.mxu0 0
        %1254 = vmatpush1.bf16.msra.mxu0 0
        %1255 = vmatprep.subr.bf16.mxu0 0
        %1256 = vmatpush1.bf16.msra.mxu0 0
        %1257 = vmatprep.subr.bf16.mxu0 0
        %1258 = vmatpush1.bf16.msra.mxu0 0
        %1259 = vmatprep.subr.bf16.mxu0 0
        %1260 = vmatpush1.bf16.msra.mxu0 0
        %1261 = vmatprep.subr.bf16.mxu0 0
        %1262 = vmatpush1.bf16.msra.mxu0 0
        %1263 = vmatprep.subr.bf16.mxu0 0
        %1264 = vmatpush1.bf16.msra.mxu0 0
        %1265 = vmatprep.subr.bf16.mxu0 0
        %1266 = vmatpush1.bf16.msra.mxu0 0
        %1267 = vmatprep.subr.bf16.mxu0 0
        %1268 = vmatpush1.bf16.msra.mxu0 0
        %1269 = vmatprep.subr.bf16.mxu0 0
        %1270 = vmatpush1.bf16.msra.mxu0 0
        %1271 = vmatprep.mubr.bf16.mxu0 0
        %1272 = vmatmul.mubr.bf16.gmra.mrb[0].mxu0 %v1081
        %v1273 = vpop.f32.mrb[0].mxu0
        %v1274 = vadd.f32 %v1063, %v1273
        %v1275 = vpop.f32.mrb[0].mxu0
        %v1276 = vpop.f32.mrb[0].mxu0
        %v1277 = vpop.f32.mrb[0].mxu0
        %1278 = vdwg.mxu0
        %v1279 = vpack.c.bf16 %v1118, %v1118
        %v1280 = vpack.c.bf16 %v1170, %v1170
        %v1281 = vpack.c.bf16 %v1222, %v1222
        %v1282 = vpack.c.bf16 %v1274, %v1274
        %1283 = vst.msk [vmem:[%s463] sm:$0xf] %vm752, %v1279
        %1284 = vst.msk [vmem:[%s463 + $0x4] sm:$0xf] %vm752, %v1280
        %1285 = vst.msk [vmem:[%s463 + $0x8] sm:$0xf] %vm752, %v1281
        %1286 = vst.msk [vmem:[%s463 + $0xc] sm:$0xf] %vm752, %v1282
        %s1287 = sand.u32 %s261, 1
        %s1288 = scalar_lea.sflag [#allocation3], %s1287
        %s1289 = sand.u32 %s261, 1
        %s1290 = smul.addr %s1289, 16
        %s1291 = scalar_lea.vmem [#allocation2], %s1290
        %s1292 = sand.u32 %s29, 1
        %s1293 = scalar_lea.sflag [#allocation5], %s1292
        %s1294 = sand.u32 %s289, 1
        %s1295 = smul.addr %s1294, 16
        %s1296 = scalar_lea.vmem [#allocation4], %s1295
        %s1297 = sand.u32 %s29, 1
        %s1298 = scalar_lea.sflag [#allocation5], %s1297
        %s1299 = sand.u32 %s317, 1
        %s1300 = smul.addr %s1299, 16
        %s1301 = scalar_lea.vmem [#allocation6], %s1300
        // Predicated region
        $region57: #{tpu_custom_call.1} parent=55 // pred_check
          %p1302 = pneg %p271
        $region58: #{tpu_custom_call.1} parent=55 // pred_check_branch
          %1304 = sbr.rel (%p1302) target = $region60
        $region59: #{tpu_custom_call.1} parent=55 // pred_region
          %s1306 = ssub.s32 256, 256
          %1307 = vsyncadd %s1288, %s1306
          %s1308 = smul.addr %s33, 4
          %s1309 = sadd.s32 %s34, %s1308
          %s1310 = smul.addr %s1309, 64
          %s1311 = scalar_lea.hbm %s9, %s1310
          %s1312 = sshll.u32 %s1291, 4
          %s1313 = int_to_ptr.vmem [resolvable:$true] %s1312
          %1318 = dma.vmem_to_hbm [thread:$0]  %s1313, 256, %s1311, %s1288, 64, 64, 4
        $region60: #{tpu_custom_call.1} parent=55 // pred_fallthru
          _
        // Predicated region
        $region61: #{tpu_custom_call.1} parent=55 // pred_check
          %p1319 = pneg %p299
        $region62: #{tpu_custom_call.1} parent=55 // pred_check_branch
          %1321 = sbr.rel (%p1319) target = $region64
        $region63: #{tpu_custom_call.1} parent=55 // pred_region
          %s1323 = ssub.s32 256, 256
          %1324 = vsyncadd %s1293, %s1323
          %s1325 = smul.addr %s33, 4
          %s1326 = sadd.s32 %s34, %s1325
          %s1327 = smul.addr %s1326, 64
          %s1328 = scalar_lea.hbm %s10, %s1327
          %s1329 = sshll.u32 %s1296, 4
          %s1330 = int_to_ptr.vmem [resolvable:$true] %s1329
          %1335 = dma.vmem_to_hbm [thread:$0]  %s1330, 256, %s1328, %s1293, 64, 64, 4
        $region64: #{tpu_custom_call.1} parent=55 // pred_fallthru
          _
        // Predicated region
        $region65: #{tpu_custom_call.1} parent=55 // pred_check
          %p1336 = pneg %p327
        $region66: #{tpu_custom_call.1} parent=55 // pred_check_branch
          %1338 = sbr.rel (%p1336) target = $region68
        $region67: #{tpu_custom_call.1} parent=55 // pred_region
          %s1340 = ssub.s32 256, 256
          %1341 = vsyncadd %s1298, %s1340
          %s1342 = smul.addr %s33, 4
          %s1343 = sadd.s32 %s34, %s1342
          %s1344 = smul.addr %s1343, 64
          %s1345 = scalar_lea.hbm %s11, %s1344
          %s1346 = sshll.u32 %s1301, 4
          %s1347 = int_to_ptr.vmem [resolvable:$true] %s1346
          %1352 = dma.vmem_to_hbm [thread:$0]  %s1347, 256, %s1345, %s1298, 64, 64, 4
        $region68: #{tpu_custom_call.1} parent=55 // pred_fallthru
          _
      $region56: #{tpu_custom_call.1} parent=5 // pred_fallthru
        _
      %p1353 = scmp.le.s32.totalorder 2, %s24
      // Predicated region
      $region69: #{tpu_custom_call.1} parent=5 // pred_check
        %p1354 = pneg %p1353
      $region70: #{tpu_custom_call.1} parent=5 // pred_check_branch
        %1356 = sbr.rel (%p1354) target = $region72
      $region71: #{tpu_custom_call.1} parent=5 // pred_region
        %s1357 = ssub.s32 %s24, 2
        // Predicated region
        $region73: #{tpu_custom_call.1} parent=71 // pred_check
          %p1358 = pneg %p277
        $region74: #{tpu_custom_call.1} parent=71 // pred_check_branch
          %1360 = sbr.rel (%p1358) target = $region76
        $region75: #{tpu_custom_call.1} parent=71 // pred_region
          %s1361 = sand.u32 %s262, 1
          %s1362 = scalar_lea.sflag [#allocation3], %s1361
          %s1363 = sand.u32 %s262, 1
          %s1364 = smul.addr %s1363, 16
          %s1365 = scalar_lea.vmem [#allocation2], %s1364
          %1366 = dma.done %s1362, 256
        $region76: #{tpu_custom_call.1} parent=71 // pred_fallthru
          _
        // Predicated region
        $region77: #{tpu_custom_call.1} parent=71 // pred_check
          %p1367 = pneg %p305
        $region78: #{tpu_custom_call.1} parent=71 // pred_check_branch
          %1369 = sbr.rel (%p1367) target = $region80
        $region79: #{tpu_custom_call.1} parent=71 // pred_region
          %s1370 = sand.u32 %s30, 1
          %s1371 = scalar_lea.sflag [#allocation5], %s1370
          %s1372 = sand.u32 %s290, 1
          %s1373 = smul.addr %s1372, 16
          %s1374 = scalar_lea.vmem [#allocation4], %s1373
          %1375 = dma.done %s1371, 256
        $region80: #{tpu_custom_call.1} parent=71 // pred_fallthru
          _
        // Predicated region
        $region81: #{tpu_custom_call.1} parent=71 // pred_check
          %p1376 = pneg %p333
        $region82: #{tpu_custom_call.1} parent=71 // pred_check_branch
          %1378 = sbr.rel (%p1376) target = $region84
        $region83: #{tpu_custom_call.1} parent=71 // pred_region
          %s1379 = sand.u32 %s30, 1
          %s1380 = scalar_lea.sflag [#allocation5], %s1379
          %s1381 = sand.u32 %s318, 1
          %s1382 = smul.addr %s1381, 16
          %s1383 = scalar_lea.vmem [#allocation6], %s1382
          %1384 = dma.done %s1380, 256
        $region84: #{tpu_custom_call.1} parent=71 // pred_fallthru
          _
      $region72: #{tpu_custom_call.1} parent=5 // pred_fallthru
        _
    $region6: #{tpu_custom_call.1} parent=1 // loop_footer
      %s28 = sadd.s32 1, %s24
    $region7: #{tpu_custom_call.1} parent=1 // loop_footer_branch
      %23 = sbr.rel target = $region3
    $region8: #{tpu_custom_call.1} parent=1 // loop_exit
      _
    %1385 = vsyncpa [#allocation3], 1
    %s1386 = scalar_lea.sflag [#allocation3], 1
    %1387 = vsyncpa %s1386, 1
    %1388 = vsyncpa [#allocation5], 1
    %s1389 = scalar_lea.sflag [#allocation5], 1
    %1390 = vsyncpa %s1389, 1

</llo_original>
